<compile_context>
chip_gen: v7x
topology: tpu7x:2x2x1
jax: 0.10.0
libtpu: 0.0.40
codegen_flags: <defaults>
</compile_context>

<pallas_src>
import jax
import jax.numpy as jnp
from jax import lax
from jax.experimental import pallas as pl
from jax.experimental.pallas import tpu as pltpu
import numpy as np

# ----------------------------- sizes ----------------------------------------
BATCH = 8
INPUT_SIZE = 16
HIDDEN = 32
NUM_CLASSES = 10
OUT_PAD = 128            # lane-dense padded classifier width
SEQ_LEN = 8              # demo streaming length

MAX_T_CHUNK = 512        # keeps double-buffered (Zx + logits) slabs << scoped VMEM
MATMUL_WEIGHT_DTYPE = jnp.float32   # set jnp.bfloat16 on v6e/v7x per review


def _pick_chunk(T: int, max_chunk: int) -> int:
    """Largest chunk <= max_chunk that divides T (T itself at demo sizes)."""
    if T <= max_chunk:
        return T
    for c in range(max_chunk, 0, -1):
        if T % c == 0:
            return c
    return 1


# ----------------------------- kernel ---------------------------------------
def _make_kernel(t_chunk: int, unroll: int):
    H = HIDDEN

    def streaming_kernel(
        zx_ref,                # (Tc, B, 4H)  precomputed x-side gate pre-activations
        h0_ref, c0_ref,        # (B, H)       initial state (read at chunk 0)
        wh_ref,                # (H, 4H)      recurrent gate weights (resident)
        wfc_ref, bfc_ref,      # (H, OUT_PAD), (1, OUT_PAD)  folded proj+attn+fc
        out_ref,               # (Tc, B, OUT_PAD)  per-step logits (padded)
        hT_ref, cT_ref,        # (B, H)       final state (written at last chunk)
        h_sc, c_sc,            # VMEM scratch: state carried across chunks
    ):
        chunk = pl.program_id(0)

        @pl.when(chunk == 0)
        def _():
            h_sc[...] = h0_ref[...]
            c_sc[...] = c0_ref[...]

        # Weights are grid-resident (same block index every chunk) -> loaded once.
        wh = wh_ref[...]
        wfc = wfc_ref[...]
        bfc = bfc_ref[...]

        def step(t, carry):
            h, c = carry
            # recurrent half of gate pre-activation; x half precomputed outside.
            z = zx_ref[t] + jnp.dot(h.astype(wh.dtype), wh,
                                    preferred_element_type=jnp.float32)
            sig = jax.nn.sigmoid(z)                    # one EUP pass over 4H lanes
            i_t = sig[:, 0 * H:1 * H]
            f_t = sig[:, 1 * H:2 * H]
            o_t = sig[:, 3 * H:4 * H]
            g_t = jnp.tanh(z[:, 2 * H:3 * H])          # tanh only on the g quarter
            c_new = f_t * c + i_t * g_t
            h_new = o_t * jnp.tanh(c_new)
            # projection + length-1 attention (softmax == 1) + classifier, folded.
            logits = jnp.dot(h_new.astype(wfc.dtype), wfc,
                             preferred_element_type=jnp.float32) + bfc
            out_ref[t] = logits.astype(out_ref.dtype)  # VMEM store; 1 HBM DMA/chunk
            return h_new, c_new

        h_f, c_f = lax.fori_loop(0, t_chunk, step, (h_sc[...], c_sc[...]),
                                 unroll=unroll)

        # carry state to the next chunk (once per chunk, not per timestep)
        h_sc[...] = h_f
        c_sc[...] = c_f

        @pl.when(chunk == pl.num_programs(0) - 1)
        def _():
            hT_ref[...] = h_f.astype(hT_ref.dtype)
            cT_ref[...] = c_f.astype(cT_ref.dtype)

    return streaming_kernel


# ----------------------------- wrappers --------------------------------------
def streaming_processor_sequence(x_seq, h0, c0, params):
    """Process T frames.  Returns (logits[T,B,C], h_T, c_T)."""
    T, B, I = x_seq.shape
    H = HIDDEN
    t_chunk = _pick_chunk(T, MAX_T_CHUNK)
    n_chunks = T // t_chunk
    unroll = min(t_chunk, 8)   # full unroll for short chunks, partial otherwise

    # Hoisted input-side gate GEMM: one batched, MXU-efficient matmul in XLA,
    # off the serial h -> z -> h dependency chain.
    zx = (x_seq @ params["wx"] + params["b_gates"]).astype(jnp.float32)  # (T,B,4H)

    wh = params["wh_mm"]           # (H, 4H)      MATMUL_WEIGHT_DTYPE
    wfc = params["wfc_pad"]        # (H, OUT_PAD) MATMUL_WEIGHT_DTYPE
    bfc = params["bfc_pad"]        # (1, OUT_PAD) f32

    kernel = _make_kernel(t_chunk, unroll)

    in_specs = [
        pl.BlockSpec((t_chunk, B, 4 * H), lambda i: (i, 0, 0)),   # Zx chunk slab
        pl.BlockSpec((B, H), lambda i: (0, 0)),                   # h0 (resident)
        pl.BlockSpec((B, H), lambda i: (0, 0)),                   # c0 (resident)
        pl.BlockSpec((H, 4 * H), lambda i: (0, 0)),               # Wh (resident)
        pl.BlockSpec((H, OUT_PAD), lambda i: (0, 0)),             # folded fc W
        pl.BlockSpec((1, OUT_PAD), lambda i: (0, 0)),             # folded fc b
    ]
    out_shapes = (
        jax.ShapeDtypeStruct((T, B, OUT_PAD), jnp.float32),
        jax.ShapeDtypeStruct((B, H), jnp.float32),
        jax.ShapeDtypeStruct((B, H), jnp.float32),
    )
    out_specs = (
        pl.BlockSpec((t_chunk, B, OUT_PAD), lambda i: (i, 0, 0)),  # logits slab
        pl.BlockSpec((B, H), lambda i: (0, 0)),
        pl.BlockSpec((B, H), lambda i: (0, 0)),
    )

    flops = T * (2 * B * H * 4 * H + 2 * B * H * OUT_PAD)
    transcendentals = T * (B * 4 * H + 2 * B * H)
    bytes_accessed = (
        4 * (zx.size + 2 * h0.size + 2 * c0.size + T * B * OUT_PAD + bfc.size)
        + wh.size * wh.dtype.itemsize + wfc.size * wfc.dtype.itemsize)

    logits_pad, h_T, c_T = pl.pallas_call(
        kernel,
        out_shape=out_shapes,
        grid=(n_chunks,),
        in_specs=in_specs,
        out_specs=out_specs,
        scratch_shapes=[pltpu.VMEM((B, H), jnp.float32),
                        pltpu.VMEM((B, H), jnp.float32)],
        compiler_params=pltpu.CompilerParams(
            dimension_semantics=("arbitrary",)),   # time chunks are sequential
        cost_estimate=pl.CostEstimate(
            flops=flops,
            transcendentals=transcendentals,
            bytes_accessed=bytes_accessed),
    )(zx, h0, c0, wh, wfc, bfc)

    return logits_pad[..., :NUM_CLASSES], h_T, c_T


def streaming_processor(x_t, h_prev, c_prev, params):
    """Single-frame interface matching the PyTorch module's forward."""
    logits, h_new, c_new = streaming_processor_sequence(
        x_t[None, :, :], h_prev, c_prev, params)
    return logits[0], h_new, c_new


# ----------------------------- parameter init -------------------------------
def init_params(key):
    """Deterministic synthetic parameters.  Linear weights stored as
    (in_features, out_features) — transposed vs. PyTorch's (out, in)."""
    ks = jax.random.split(key, 16)

    def lin(k, fan_in, fan_out):
        kw, kb = jax.random.split(k)
        bound = 1.0 / np.sqrt(fan_in)
        w = jax.random.uniform(kw, (fan_in, fan_out), jnp.float32, -bound, bound)
        b = jax.random.uniform(kb, (1, fan_out), jnp.float32, -bound, bound)
        return w, b

    # 4 input-gate linears (input -> hidden), gate order [i, f, g, o]
    wx_list, bx_list = zip(*[lin(ks[i], INPUT_SIZE, HIDDEN) for i in range(4)])
    # 4 hidden-gate linears (hidden -> hidden)
    wh_list, bh_list = zip(*[lin(ks[4 + i], HIDDEN, HIDDEN) for i in range(4)])

    wx = jnp.concatenate(wx_list, axis=1)                       # (I, 4H)
    wh = jnp.concatenate(wh_list, axis=1)                       # (H, 4H)
    b_gates = (jnp.concatenate(bx_list, axis=1)
               + jnp.concatenate(bh_list, axis=1))              # (1, 4H)

    wp, bp = lin(ks[8], HIDDEN, HIDDEN)                         # projection
    wa, ba = lin(ks[9], HIDDEN, 1)                              # attention score
    wf, bf = lin(ks[10], HIDDEN, NUM_CLASSES)                   # classifier

    # ---- offline folds ------------------------------------------------------
    # softmax over a length-1 sequence is exactly 1 -> attention folds out:
    #   logits = (h @ wp + bp) @ wf + bf = h @ (wp @ wf) + (bp @ wf + bf)
    wfc = wp @ wf                                               # (H, C)
    bfc = bp @ wf + bf                                          # (1, C)
    # lane-dense zero padding for an unmasked output store
    wfc_pad = jnp.zeros((HIDDEN, OUT_PAD), jnp.float32).at[:, :NUM_CLASSES].set(wfc)
    bfc_pad = jnp.zeros((1, OUT_PAD), jnp.float32).at[:, :NUM_CLASSES].set(bfc)

    return dict(
        # raw (unfused) params for the pure-JAX reference and the Zx precompute
        wx=wx, wh=wh, b=b_gates, wp=wp, bp=bp, wa=wa, ba=ba, wf=wf, bf=bf,
        b_gates=b_gates,
        # params consumed by the kernel (matmul-input dtype selectable)
        wh_mm=wh.astype(MATMUL_WEIGHT_DTYPE),
        wfc_pad=wfc_pad.astype(MATMUL_WEIGHT_DTYPE),
        bfc_pad=bfc_pad,
    )


# ----------------------------- pure-JAX reference ----------------------------
def reference_step(x_t, h_prev, c_prev, p):
    """Unfused reference matching the PyTorch module exactly."""
    H = HIDDEN
    z = x_t @ p["wx"] + h_prev @ p["wh"] + p["b"]
    i_t = jax.nn.sigmoid(z[:, 0 * H:1 * H])
    f_t = jax.nn.sigmoid(z[:, 1 * H:2 * H])
    g_t = jnp.tanh(z[:, 2 * H:3 * H])
    o_t = jax.nn.sigmoid(z[:, 3 * H:4 * H])
    c_new = f_t * c_prev + i_t * g_t
    h_new = o_t * jnp.tanh(c_new)
    proj = h_new @ p["wp"] + p["bp"]
    score = proj @ p["wa"] + p["ba"]                              # (B, 1)
    attn_w = jax.nn.softmax(score[:, None, :], axis=1)[:, 0, :]   # == 1 (len-1 seq)
    attended = proj * attn_w
    logits = attended @ p["wf"] + p["bf"]
    return logits, h_new, c_new


def reference_sequence(x_seq, h0, c0, p):
    h, c = h0, c0
    outs = []
    for t in range(x_seq.shape[0]):
        logits, h, c = reference_step(x_seq[t], h, c, p)
        outs.append(logits)
    return jnp.stack(outs, axis=0), h, c


# ----------------------------- main ------------------------------------------
if __name__ == "__main__":
    key = jax.random.PRNGKey(0)
    k_x, k_h, k_c, k_p = jax.random.split(key, 4)

    x_seq = jax.random.normal(k_x, (SEQ_LEN, BATCH, INPUT_SIZE), jnp.float32)
    h0 = jax.random.normal(k_h, (BATCH, HIDDEN), jnp.float32)
    c0 = jax.random.normal(k_c, (BATCH, HIDDEN), jnp.float32)
    params = init_params(k_p)

    # ---- streaming (T timesteps, one grid chunk, in-kernel time loop) -------
    logits_seq, h_T, c_T = streaming_processor_sequence(x_seq, h0, c0, params)
    jax.block_until_ready((logits_seq, h_T, c_T))

    ref_seq, ref_hT, ref_cT = reference_sequence(x_seq, h0, c0, params)
    np.testing.assert_allclose(np.asarray(logits_seq), np.asarray(ref_seq),
                               rtol=1e-2, atol=1e-3)
    np.testing.assert_allclose(np.asarray(h_T), np.asarray(ref_hT),
                               rtol=1e-2, atol=1e-3)
    np.testing.assert_allclose(np.asarray(c_T), np.asarray(ref_cT),
                               rtol=1e-2, atol=1e-3)

    # ---- single-frame interface (module's forward signature) ----------------
    logits_1, h_1, c_1 = streaming_processor(x_seq[0], h0, c0, params)
    jax.block_until_ready((logits_1, h_1, c_1))

    ref_l1, ref_h1, ref_c1 = reference_step(x_seq[0], h0, c0, params)
    np.testing.assert_allclose(np.asarray(logits_1), np.asarray(ref_l1),
                               rtol=1e-2, atol=1e-3)
    np.testing.assert_allclose(np.asarray(h_1), np.asarray(ref_h1),
                               rtol=1e-2, atol=1e-3)
    np.testing.assert_allclose(np.asarray(c_1), np.asarray(ref_c1),
                               rtol=1e-2, atol=1e-3)

    print("KERNEL_OK")
</pallas_src>

<mosaic_0001>
module attributes {stable_mosaic.version = 11 : i64} {
  func.func @streaming_kernel(%arg0: i32, %arg1: memref<8x8x128xf32, #tpu.memory_space<vmem>>, %arg2: memref<8x32xf32, #tpu.memory_space<vmem>>, %arg3: memref<8x32xf32, #tpu.memory_space<vmem>>, %arg4: memref<32x128xf32, #tpu.memory_space<vmem>>, %arg5: memref<32x128xf32, #tpu.memory_space<vmem>>, %arg6: memref<1x128xf32, #tpu.memory_space<vmem>>, %arg7: memref<8x8x128xf32, #tpu.memory_space<vmem>>, %arg8: memref<8x32xf32, #tpu.memory_space<vmem>>, %arg9: memref<8x32xf32, #tpu.memory_space<vmem>>, %arg10: memref<8x32xf32, #tpu.memory_space<vmem>>, %arg11: memref<8x32xf32, #tpu.memory_space<vmem>>) attributes {dimension_semantics = [#tpu.dimension_semantics<arbitrary>], iteration_bounds = array<i64: 1>, scalar_prefetch = 0 : i64, scratch_operands = 2 : i64, tpu.core_type = #tpu.core_type<tc>, window_params = [{transform_indices = @transform_0, window_bounds = array<i64: 8, 8, 128>}, {pipeline_mode = #tpu.pipeline_mode<synchronous>, transform_indices = @transform_1, window_bounds = array<i64: 8, 32>}, {pipeline_mode = #tpu.pipeline_mode<synchronous>, transform_indices = @transform_2, window_bounds = array<i64: 8, 32>}, {pipeline_mode = #tpu.pipeline_mode<synchronous>, transform_indices = @transform_3, window_bounds = array<i64: 32, 128>}, {pipeline_mode = #tpu.pipeline_mode<synchronous>, transform_indices = @transform_4, window_bounds = array<i64: 32, 128>}, {pipeline_mode = #tpu.pipeline_mode<synchronous>, transform_indices = @transform_5, window_bounds = array<i64: 1, 128>}, {transform_indices = @transform_6, window_bounds = array<i64: 8, 8, 128>}, {pipeline_mode = #tpu.pipeline_mode<synchronous>, transform_indices = @transform_7, window_bounds = array<i64: 8, 32>}, {pipeline_mode = #tpu.pipeline_mode<synchronous>, transform_indices = @transform_8, window_bounds = array<i64: 8, 32>}]} {
    %c0_i32 = arith.constant 0 : i32
    %0 = arith.cmpi eq, %arg0, %c0_i32 : i32
    %1 = arith.extui %0 : i1 to i32
    %c0_i32_0 = arith.constant 0 : i32
    %2 = arith.cmpi ne, %1, %c0_i32_0 : i32
    scf.if %2 {
      %c0_72 = arith.constant 0 : index
      %c0_73 = arith.constant 0 : index
      %229 = vector.load %arg2[%c0_72, %c0_73] : memref<8x32xf32, #tpu.memory_space<vmem>>, vector<8x32xf32>
      %c0_74 = arith.constant 0 : index
      %c0_75 = arith.constant 0 : index
      %230 = vector.load %arg10[%c0_74, %c0_75] : memref<8x32xf32, #tpu.memory_space<vmem>>, vector<8x32xf32>
      tpu.vector_store %arg10[%c0_74, %c0_75], %229 {strides = array<i32>} : memref<8x32xf32, #tpu.memory_space<vmem>>, vector<8x32xf32>,
      %c0_76 = arith.constant 0 : index
      %c0_77 = arith.constant 0 : index
      %231 = vector.load %arg3[%c0_76, %c0_77] : memref<8x32xf32, #tpu.memory_space<vmem>>, vector<8x32xf32>
      %c0_78 = arith.constant 0 : index
      %c0_79 = arith.constant 0 : index
      %232 = vector.load %arg11[%c0_78, %c0_79] : memref<8x32xf32, #tpu.memory_space<vmem>>, vector<8x32xf32>
      tpu.vector_store %arg11[%c0_78, %c0_79], %231 {strides = array<i32>} : memref<8x32xf32, #tpu.memory_space<vmem>>, vector<8x32xf32>,
    } else {
    }
    %c0 = arith.constant 0 : index
    %c0_1 = arith.constant 0 : index
    %3 = vector.load %arg4[%c0, %c0_1] : memref<32x128xf32, #tpu.memory_space<vmem>>, vector<32x128xf32>
    %c0_2 = arith.constant 0 : index
    %c0_3 = arith.constant 0 : index
    %4 = vector.load %arg5[%c0_2, %c0_3] : memref<32x128xf32, #tpu.memory_space<vmem>>, vector<32x128xf32>
    %c0_4 = arith.constant 0 : index
    %c0_5 = arith.constant 0 : index
    %5 = vector.load %arg6[%c0_4, %c0_5] : memref<1x128xf32, #tpu.memory_space<vmem>>, vector<1x128xf32>
    %c0_6 = arith.constant 0 : index
    %c0_7 = arith.constant 0 : index
    %6 = vector.load %arg10[%c0_6, %c0_7] : memref<8x32xf32, #tpu.memory_space<vmem>>, vector<8x32xf32>
    %c0_8 = arith.constant 0 : index
    %c0_9 = arith.constant 0 : index
    %7 = vector.load %arg11[%c0_8, %c0_9] : memref<8x32xf32, #tpu.memory_space<vmem>>, vector<8x32xf32>
    %c0_i32_10 = arith.constant 0 : i32
    %8 = arith.index_cast %c0_i32_10 : i32 to index
    %c0_11 = arith.constant 0 : index
    %c0_12 = arith.constant 0 : index
    %9 = vector.load %arg1[%8, %c0_11, %c0_12] : memref<8x8x128xf32, #tpu.memory_space<vmem>>, vector<1x8x128xf32>
    %10 = vector.shape_cast %9 : vector<1x8x128xf32> to vector<8x128xf32>
    %cst = arith.constant dense<0.000000e+00> : vector<8x128xf32>
    %11 = tpu.matmul %6, %3, %cst {dimension_numbers = #tpu.dot_dimension_numbers<[1], [0], [0], [1], [0, 0, 1, 1], [], []>} : vector<8x32xf32>, vector<32x128xf32>, vector<8x128xf32> -> vector<8x128xf32>
    %12 = arith.addf %10, %11 : vector<8x128xf32>
    %13 = arith.negf %12 : vector<8x128xf32>
    %14 = math.exp %13 : vector<8x128xf32>
    %cst_13 = arith.constant 1.000000e+00 : f32
    %15 = vector.broadcast %cst_13 : f32 to vector<8x128xf32>
    %16 = arith.addf %15, %14 : vector<8x128xf32>
    %17 = arith.divf %15, %16 : vector<8x128xf32>
    %18 = vector.extract_strided_slice %17 {offsets = [0, 0], sizes = [8, 32], strides = [1, 1]} : vector<8x128xf32> to vector<8x32xf32>
    %19 = vector.extract_strided_slice %17 {offsets = [0, 32], sizes = [8, 32], strides = [1, 1]} : vector<8x128xf32> to vector<8x32xf32>
    %20 = vector.extract_strided_slice %17 {offsets = [0, 96], sizes = [8, 32], strides = [1, 1]} : vector<8x128xf32> to vector<8x32xf32>
    %21 = vector.extract_strided_slice %12 {offsets = [0, 64], sizes = [8, 32], strides = [1, 1]} : vector<8x128xf32> to vector<8x32xf32>
    %22 = math.tanh %21 : vector<8x32xf32>
    %23 = arith.mulf %19, %7 : vector<8x32xf32>
    %24 = arith.mulf %18, %22 : vector<8x32xf32>
    %25 = arith.addf %23, %24 : vector<8x32xf32>
    %26 = math.tanh %25 : vector<8x32xf32>
    %27 = arith.mulf %20, %26 : vector<8x32xf32>
    %cst_14 = arith.constant dense<0.000000e+00> : vector<8x128xf32>
    %28 = tpu.matmul %27, %4, %cst_14 {dimension_numbers = #tpu.dot_dimension_numbers<[1], [0], [0], [1], [0, 0, 1, 1], [], []>} : vector<8x32xf32>, vector<32x128xf32>, vector<8x128xf32> -> vector<8x128xf32>
    %29 = vector.broadcast %5 : vector<1x128xf32> to vector<8x128xf32>
    %30 = arith.addf %28, %29 : vector<8x128xf32>
    %31 = arith.index_cast %c0_i32_10 : i32 to index
    %c0_15 = arith.constant 0 : index
    %c0_16 = arith.constant 0 : index
    %32 = vector.load %arg7[%31, %c0_15, %c0_16] : memref<8x8x128xf32, #tpu.memory_space<vmem>>, vector<1x8x128xf32>
    %33 = vector.shape_cast %32 : vector<1x8x128xf32> to vector<8x128xf32>
    %34 = vector.shape_cast %30 : vector<8x128xf32> to vector<1x8x128xf32>
    tpu.vector_store %arg7[%31, %c0_15, %c0_16], %34 {strides = array<i32>} : memref<8x8x128xf32, #tpu.memory_space<vmem>>, vector<1x8x128xf32>,
    %c1_i32 = arith.constant 1 : i32
    %35 = arith.index_cast %c1_i32 : i32 to index
    %c0_17 = arith.constant 0 : index
    %c0_18 = arith.constant 0 : index
    %36 = vector.load %arg1[%35, %c0_17, %c0_18] : memref<8x8x128xf32, #tpu.memory_space<vmem>>, vector<1x8x128xf32>
    %37 = vector.shape_cast %36 : vector<1x8x128xf32> to vector<8x128xf32>
    %cst_19 = arith.constant dense<0.000000e+00> : vector<8x128xf32>
    %38 = tpu.matmul %27, %3, %cst_19 {dimension_numbers = #tpu.dot_dimension_numbers<[1], [0], [0], [1], [0, 0, 1, 1], [], []>} : vector<8x32xf32>, vector<32x128xf32>, vector<8x128xf32> -> vector<8x128xf32>
    %39 = arith.addf %37, %38 : vector<8x128xf32>
    %40 = arith.negf %39 : vector<8x128xf32>
    %41 = math.exp %40 : vector<8x128xf32>
    %cst_20 = arith.constant 1.000000e+00 : f32
    %42 = vector.broadcast %cst_20 : f32 to vector<8x128xf32>
    %43 = arith.addf %42, %41 : vector<8x128xf32>
    %44 = arith.divf %42, %43 : vector<8x128xf32>
    %45 = vector.extract_strided_slice %44 {offsets = [0, 0], sizes = [8, 32], strides = [1, 1]} : vector<8x128xf32> to vector<8x32xf32>
    %46 = vector.extract_strided_slice %44 {offsets = [0, 32], sizes = [8, 32], strides = [1, 1]} : vector<8x128xf32> to vector<8x32xf32>
    %47 = vector.extract_strided_slice %44 {offsets = [0, 96], sizes = [8, 32], strides = [1, 1]} : vector<8x128xf32> to vector<8x32xf32>
    %48 = vector.extract_strided_slice %39 {offsets = [0, 64], sizes = [8, 32], strides = [1, 1]} : vector<8x128xf32> to vector<8x32xf32>
    %49 = math.tanh %48 : vector<8x32xf32>
    %50 = arith.mulf %46, %25 : vector<8x32xf32>
    %51 = arith.mulf %45, %49 : vector<8x32xf32>
    %52 = arith.addf %50, %51 : vector<8x32xf32>
    %53 = math.tanh %52 : vector<8x32xf32>
    %54 = arith.mulf %47, %53 : vector<8x32xf32>
    %cst_21 = arith.constant dense<0.000000e+00> : vector<8x128xf32>
    %55 = tpu.matmul %54, %4, %cst_21 {dimension_numbers = #tpu.dot_dimension_numbers<[1], [0], [0], [1], [0, 0, 1, 1], [], []>} : vector<8x32xf32>, vector<32x128xf32>, vector<8x128xf32> -> vector<8x128xf32>
    %56 = vector.broadcast %5 : vector<1x128xf32> to vector<8x128xf32>
    %57 = arith.addf %55, %56 : vector<8x128xf32>
    %58 = arith.index_cast %c1_i32 : i32 to index
    %c0_22 = arith.constant 0 : index
    %c0_23 = arith.constant 0 : index
    %59 = vector.load %arg7[%58, %c0_22, %c0_23] : memref<8x8x128xf32, #tpu.memory_space<vmem>>, vector<1x8x128xf32>
    %60 = vector.shape_cast %59 : vector<1x8x128xf32> to vector<8x128xf32>
    %61 = vector.shape_cast %57 : vector<8x128xf32> to vector<1x8x128xf32>
    tpu.vector_store %arg7[%58, %c0_22, %c0_23], %61 {strides = array<i32>} : memref<8x8x128xf32, #tpu.memory_space<vmem>>, vector<1x8x128xf32>,
    %c2_i32 = arith.constant 2 : i32
    %62 = arith.index_cast %c2_i32 : i32 to index
    %c0_24 = arith.constant 0 : index
    %c0_25 = arith.constant 0 : index
    %63 = vector.load %arg1[%62, %c0_24, %c0_25] : memref<8x8x128xf32, #tpu.memory_space<vmem>>, vector<1x8x128xf32>
    %64 = vector.shape_cast %63 : vector<1x8x128xf32> to vector<8x128xf32>
    %cst_26 = arith.constant dense<0.000000e+00> : vector<8x128xf32>
    %65 = tpu.matmul %54, %3, %cst_26 {dimension_numbers = #tpu.dot_dimension_numbers<[1], [0], [0], [1], [0, 0, 1, 1], [], []>} : vector<8x32xf32>, vector<32x128xf32>, vector<8x128xf32> -> vector<8x128xf32>
    %66 = arith.addf %64, %65 : vector<8x128xf32>
    %67 = arith.negf %66 : vector<8x128xf32>
    %68 = math.exp %67 : vector<8x128xf32>
    %cst_27 = arith.constant 1.000000e+00 : f32
    %69 = vector.broadcast %cst_27 : f32 to vector<8x128xf32>
    %70 = arith.addf %69, %68 : vector<8x128xf32>
    %71 = arith.divf %69, %70 : vector<8x128xf32>
    %72 = vector.extract_strided_slice %71 {offsets = [0, 0], sizes = [8, 32], strides = [1, 1]} : vector<8x128xf32> to vector<8x32xf32>
    %73 = vector.extract_strided_slice %71 {offsets = [0, 32], sizes = [8, 32], strides = [1, 1]} : vector<8x128xf32> to vector<8x32xf32>
    %74 = vector.extract_strided_slice %71 {offsets = [0, 96], sizes = [8, 32], strides = [1, 1]} : vector<8x128xf32> to vector<8x32xf32>
    %75 = vector.extract_strided_slice %66 {offsets = [0, 64], sizes = [8, 32], strides = [1, 1]} : vector<8x128xf32> to vector<8x32xf32>
    %76 = math.tanh %75 : vector<8x32xf32>
    %77 = arith.mulf %73, %52 : vector<8x32xf32>
    %78 = arith.mulf %72, %76 : vector<8x32xf32>
    %79 = arith.addf %77, %78 : vector<8x32xf32>
    %80 = math.tanh %79 : vector<8x32xf32>
    %81 = arith.mulf %74, %80 : vector<8x32xf32>
    %cst_28 = arith.constant dense<0.000000e+00> : vector<8x128xf32>
    %82 = tpu.matmul %81, %4, %cst_28 {dimension_numbers = #tpu.dot_dimension_numbers<[1], [0], [0], [1], [0, 0, 1, 1], [], []>} : vector<8x32xf32>, vector<32x128xf32>, vector<8x128xf32> -> vector<8x128xf32>
    %83 = vector.broadcast %5 : vector<1x128xf32> to vector<8x128xf32>
    %84 = arith.addf %82, %83 : vector<8x128xf32>
    %85 = arith.index_cast %c2_i32 : i32 to index
    %c0_29 = arith.constant 0 : index
    %c0_30 = arith.constant 0 : index
    %86 = vector.load %arg7[%85, %c0_29, %c0_30] : memref<8x8x128xf32, #tpu.memory_space<vmem>>, vector<1x8x128xf32>
    %87 = vector.shape_cast %86 : vector<1x8x128xf32> to vector<8x128xf32>
    %88 = vector.shape_cast %84 : vector<8x128xf32> to vector<1x8x128xf32>
    tpu.vector_store %arg7[%85, %c0_29, %c0_30], %88 {strides = array<i32>} : memref<8x8x128xf32, #tpu.memory_space<vmem>>, vector<1x8x128xf32>,
    %c3_i32 = arith.constant 3 : i32
    %89 = arith.index_cast %c3_i32 : i32 to index
    %c0_31 = arith.constant 0 : index
    %c0_32 = arith.constant 0 : index
    %90 = vector.load %arg1[%89, %c0_31, %c0_32] : memref<8x8x128xf32, #tpu.memory_space<vmem>>, vector<1x8x128xf32>
    %91 = vector.shape_cast %90 : vector<1x8x128xf32> to vector<8x128xf32>
    %cst_33 = arith.constant dense<0.000000e+00> : vector<8x128xf32>
    %92 = tpu.matmul %81, %3, %cst_33 {dimension_numbers = #tpu.dot_dimension_numbers<[1], [0], [0], [1], [0, 0, 1, 1], [], []>} : vector<8x32xf32>, vector<32x128xf32>, vector<8x128xf32> -> vector<8x128xf32>
    %93 = arith.addf %91, %92 : vector<8x128xf32>
    %94 = arith.negf %93 : vector<8x128xf32>
    %95 = math.exp %94 : vector<8x128xf32>
    %cst_34 = arith.constant 1.000000e+00 : f32
    %96 = vector.broadcast %cst_34 : f32 to vector<8x128xf32>
    %97 = arith.addf %96, %95 : vector<8x128xf32>
    %98 = arith.divf %96, %97 : vector<8x128xf32>
    %99 = vector.extract_strided_slice %98 {offsets = [0, 0], sizes = [8, 32], strides = [1, 1]} : vector<8x128xf32> to vector<8x32xf32>
    %100 = vector.extract_strided_slice %98 {offsets = [0, 32], sizes = [8, 32], strides = [1, 1]} : vector<8x128xf32> to vector<8x32xf32>
    %101 = vector.extract_strided_slice %98 {offsets = [0, 96], sizes = [8, 32], strides = [1, 1]} : vector<8x128xf32> to vector<8x32xf32>
    %102 = vector.extract_strided_slice %93 {offsets = [0, 64], sizes = [8, 32], strides = [1, 1]} : vector<8x128xf32> to vector<8x32xf32>
    %103 = math.tanh %102 : vector<8x32xf32>
    %104 = arith.mulf %100, %79 : vector<8x32xf32>
    %105 = arith.mulf %99, %103 : vector<8x32xf32>
    %106 = arith.addf %104, %105 : vector<8x32xf32>
    %107 = math.tanh %106 : vector<8x32xf32>
    %108 = arith.mulf %101, %107 : vector<8x32xf32>
    %cst_35 = arith.constant dense<0.000000e+00> : vector<8x128xf32>
    %109 = tpu.matmul %108, %4, %cst_35 {dimension_numbers = #tpu.dot_dimension_numbers<[1], [0], [0], [1], [0, 0, 1, 1], [], []>} : vector<8x32xf32>, vector<32x128xf32>, vector<8x128xf32> -> vector<8x128xf32>
    %110 = vector.broadcast %5 : vector<1x128xf32> to vector<8x128xf32>
    %111 = arith.addf %109, %110 : vector<8x128xf32>
    %112 = arith.index_cast %c3_i32 : i32 to index
    %c0_36 = arith.constant 0 : index
    %c0_37 = arith.constant 0 : index
    %113 = vector.load %arg7[%112, %c0_36, %c0_37] : memref<8x8x128xf32, #tpu.memory_space<vmem>>, vector<1x8x128xf32>
    %114 = vector.shape_cast %113 : vector<1x8x128xf32> to vector<8x128xf32>
    %115 = vector.shape_cast %111 : vector<8x128xf32> to vector<1x8x128xf32>
    tpu.vector_store %arg7[%112, %c0_36, %c0_37], %115 {strides = array<i32>} : memref<8x8x128xf32, #tpu.memory_space<vmem>>, vector<1x8x128xf32>,
    %c4_i32 = arith.constant 4 : i32
    %116 = arith.index_cast %c4_i32 : i32 to index
    %c0_38 = arith.constant 0 : index
    %c0_39 = arith.constant 0 : index
    %117 = vector.load %arg1[%116, %c0_38, %c0_39] : memref<8x8x128xf32, #tpu.memory_space<vmem>>, vector<1x8x128xf32>
    %118 = vector.shape_cast %117 : vector<1x8x128xf32> to vector<8x128xf32>
    %cst_40 = arith.constant dense<0.000000e+00> : vector<8x128xf32>
    %119 = tpu.matmul %108, %3, %cst_40 {dimension_numbers = #tpu.dot_dimension_numbers<[1], [0], [0], [1], [0, 0, 1, 1], [], []>} : vector<8x32xf32>, vector<32x128xf32>, vector<8x128xf32> -> vector<8x128xf32>
    %120 = arith.addf %118, %119 : vector<8x128xf32>
    %121 = arith.negf %120 : vector<8x128xf32>
    %122 = math.exp %121 : vector<8x128xf32>
    %cst_41 = arith.constant 1.000000e+00 : f32
    %123 = vector.broadcast %cst_41 : f32 to vector<8x128xf32>
    %124 = arith.addf %123, %122 : vector<8x128xf32>
    %125 = arith.divf %123, %124 : vector<8x128xf32>
    %126 = vector.extract_strided_slice %125 {offsets = [0, 0], sizes = [8, 32], strides = [1, 1]} : vector<8x128xf32> to vector<8x32xf32>
    %127 = vector.extract_strided_slice %125 {offsets = [0, 32], sizes = [8, 32], strides = [1, 1]} : vector<8x128xf32> to vector<8x32xf32>
    %128 = vector.extract_strided_slice %125 {offsets = [0, 96], sizes = [8, 32], strides = [1, 1]} : vector<8x128xf32> to vector<8x32xf32>
    %129 = vector.extract_strided_slice %120 {offsets = [0, 64], sizes = [8, 32], strides = [1, 1]} : vector<8x128xf32> to vector<8x32xf32>
    %130 = math.tanh %129 : vector<8x32xf32>
    %131 = arith.mulf %127, %106 : vector<8x32xf32>
    %132 = arith.mulf %126, %130 : vector<8x32xf32>
    %133 = arith.addf %131, %132 : vector<8x32xf32>
    %134 = math.tanh %133 : vector<8x32xf32>
    %135 = arith.mulf %128, %134 : vector<8x32xf32>
    %cst_42 = arith.constant dense<0.000000e+00> : vector<8x128xf32>
    %136 = tpu.matmul %135, %4, %cst_42 {dimension_numbers = #tpu.dot_dimension_numbers<[1], [0], [0], [1], [0, 0, 1, 1], [], []>} : vector<8x32xf32>, vector<32x128xf32>, vector<8x128xf32> -> vector<8x128xf32>
    %137 = vector.broadcast %5 : vector<1x128xf32> to vector<8x128xf32>
    %138 = arith.addf %136, %137 : vector<8x128xf32>
    %139 = arith.index_cast %c4_i32 : i32 to index
    %c0_43 = arith.constant 0 : index
    %c0_44 = arith.constant 0 : index
    %140 = vector.load %arg7[%139, %c0_43, %c0_44] : memref<8x8x128xf32, #tpu.memory_space<vmem>>, vector<1x8x128xf32>
    %141 = vector.shape_cast %140 : vector<1x8x128xf32> to vector<8x128xf32>
    %142 = vector.shape_cast %138 : vector<8x128xf32> to vector<1x8x128xf32>
    tpu.vector_store %arg7[%139, %c0_43, %c0_44], %142 {strides = array<i32>} : memref<8x8x128xf32, #tpu.memory_space<vmem>>, vector<1x8x128xf32>,
    %c5_i32 = arith.constant 5 : i32
    %143 = arith.index_cast %c5_i32 : i32 to index
    %c0_45 = arith.constant 0 : index
    %c0_46 = arith.constant 0 : index
    %144 = vector.load %arg1[%143, %c0_45, %c0_46] : memref<8x8x128xf32, #tpu.memory_space<vmem>>, vector<1x8x128xf32>
    %145 = vector.shape_cast %144 : vector<1x8x128xf32> to vector<8x128xf32>
    %cst_47 = arith.constant dense<0.000000e+00> : vector<8x128xf32>
    %146 = tpu.matmul %135, %3, %cst_47 {dimension_numbers = #tpu.dot_dimension_numbers<[1], [0], [0], [1], [0, 0, 1, 1], [], []>} : vector<8x32xf32>, vector<32x128xf32>, vector<8x128xf32> -> vector<8x128xf32>
    %147 = arith.addf %145, %146 : vector<8x128xf32>
    %148 = arith.negf %147 : vector<8x128xf32>
    %149 = math.exp %148 : vector<8x128xf32>
    %cst_48 = arith.constant 1.000000e+00 : f32
    %150 = vector.broadcast %cst_48 : f32 to vector<8x128xf32>
    %151 = arith.addf %150, %149 : vector<8x128xf32>
    %152 = arith.divf %150, %151 : vector<8x128xf32>
    %153 = vector.extract_strided_slice %152 {offsets = [0, 0], sizes = [8, 32], strides = [1, 1]} : vector<8x128xf32> to vector<8x32xf32>
    %154 = vector.extract_strided_slice %152 {offsets = [0, 32], sizes = [8, 32], strides = [1, 1]} : vector<8x128xf32> to vector<8x32xf32>
    %155 = vector.extract_strided_slice %152 {offsets = [0, 96], sizes = [8, 32], strides = [1, 1]} : vector<8x128xf32> to vector<8x32xf32>
    %156 = vector.extract_strided_slice %147 {offsets = [0, 64], sizes = [8, 32], strides = [1, 1]} : vector<8x128xf32> to vector<8x32xf32>
    %157 = math.tanh %156 : vector<8x32xf32>
    %158 = arith.mulf %154, %133 : vector<8x32xf32>
    %159 = arith.mulf %153, %157 : vector<8x32xf32>
    %160 = arith.addf %158, %159 : vector<8x32xf32>
    %161 = math.tanh %160 : vector<8x32xf32>
    %162 = arith.mulf %155, %161 : vector<8x32xf32>
    %cst_49 = arith.constant dense<0.000000e+00> : vector<8x128xf32>
    %163 = tpu.matmul %162, %4, %cst_49 {dimension_numbers = #tpu.dot_dimension_numbers<[1], [0], [0], [1], [0, 0, 1, 1], [], []>} : vector<8x32xf32>, vector<32x128xf32>, vector<8x128xf32> -> vector<8x128xf32>
    %164 = vector.broadcast %5 : vector<1x128xf32> to vector<8x128xf32>
    %165 = arith.addf %163, %164 : vector<8x128xf32>
    %166 = arith.index_cast %c5_i32 : i32 to index
    %c0_50 = arith.constant 0 : index
    %c0_51 = arith.constant 0 : index
    %167 = vector.load %arg7[%166, %c0_50, %c0_51] : memref<8x8x128xf32, #tpu.memory_space<vmem>>, vector<1x8x128xf32>
    %168 = vector.shape_cast %167 : vector<1x8x128xf32> to vector<8x128xf32>
    %169 = vector.shape_cast %165 : vector<8x128xf32> to vector<1x8x128xf32>
    tpu.vector_store %arg7[%166, %c0_50, %c0_51], %169 {strides = array<i32>} : memref<8x8x128xf32, #tpu.memory_space<vmem>>, vector<1x8x128xf32>,
    %c6_i32 = arith.constant 6 : i32
    %170 = arith.index_cast %c6_i32 : i32 to index
    %c0_52 = arith.constant 0 : index
    %c0_53 = arith.constant 0 : index
    %171 = vector.load %arg1[%170, %c0_52, %c0_53] : memref<8x8x128xf32, #tpu.memory_space<vmem>>, vector<1x8x128xf32>
    %172 = vector.shape_cast %171 : vector<1x8x128xf32> to vector<8x128xf32>
    %cst_54 = arith.constant dense<0.000000e+00> : vector<8x128xf32>
    %173 = tpu.matmul %162, %3, %cst_54 {dimension_numbers = #tpu.dot_dimension_numbers<[1], [0], [0], [1], [0, 0, 1, 1], [], []>} : vector<8x32xf32>, vector<32x128xf32>, vector<8x128xf32> -> vector<8x128xf32>
    %174 = arith.addf %172, %173 : vector<8x128xf32>
    %175 = arith.negf %174 : vector<8x128xf32>
    %176 = math.exp %175 : vector<8x128xf32>
    %cst_55 = arith.constant 1.000000e+00 : f32
    %177 = vector.broadcast %cst_55 : f32 to vector<8x128xf32>
    %178 = arith.addf %177, %176 : vector<8x128xf32>
    %179 = arith.divf %177, %178 : vector<8x128xf32>
    %180 = vector.extract_strided_slice %179 {offsets = [0, 0], sizes = [8, 32], strides = [1, 1]} : vector<8x128xf32> to vector<8x32xf32>
    %181 = vector.extract_strided_slice %179 {offsets = [0, 32], sizes = [8, 32], strides = [1, 1]} : vector<8x128xf32> to vector<8x32xf32>
    %182 = vector.extract_strided_slice %179 {offsets = [0, 96], sizes = [8, 32], strides = [1, 1]} : vector<8x128xf32> to vector<8x32xf32>
    %183 = vector.extract_strided_slice %174 {offsets = [0, 64], sizes = [8, 32], strides = [1, 1]} : vector<8x128xf32> to vector<8x32xf32>
    %184 = math.tanh %183 : vector<8x32xf32>
    %185 = arith.mulf %181, %160 : vector<8x32xf32>
    %186 = arith.mulf %180, %184 : vector<8x32xf32>
    %187 = arith.addf %185, %186 : vector<8x32xf32>
    %188 = math.tanh %187 : vector<8x32xf32>
    %189 = arith.mulf %182, %188 : vector<8x32xf32>
    %cst_56 = arith.constant dense<0.000000e+00> : vector<8x128xf32>
    %190 = tpu.matmul %189, %4, %cst_56 {dimension_numbers = #tpu.dot_dimension_numbers<[1], [0], [0], [1], [0, 0, 1, 1], [], []>} : vector<8x32xf32>, vector<32x128xf32>, vector<8x128xf32> -> vector<8x128xf32>
    %191 = vector.broadcast %5 : vector<1x128xf32> to vector<8x128xf32>
    %192 = arith.addf %190, %191 : vector<8x128xf32>
    %193 = arith.index_cast %c6_i32 : i32 to index
    %c0_57 = arith.constant 0 : index
    %c0_58 = arith.constant 0 : index
    %194 = vector.load %arg7[%193, %c0_57, %c0_58] : memref<8x8x128xf32, #tpu.memory_space<vmem>>, vector<1x8x128xf32>
    %195 = vector.shape_cast %194 : vector<1x8x128xf32> to vector<8x128xf32>
    %196 = vector.shape_cast %192 : vector<8x128xf32> to vector<1x8x128xf32>
    tpu.vector_store %arg7[%193, %c0_57, %c0_58], %196 {strides = array<i32>} : memref<8x8x128xf32, #tpu.memory_space<vmem>>, vector<1x8x128xf32>,
    %c7_i32 = arith.constant 7 : i32
    %197 = arith.index_cast %c7_i32 : i32 to index
    %c0_59 = arith.constant 0 : index
    %c0_60 = arith.constant 0 : index
    %198 = vector.load %arg1[%197, %c0_59, %c0_60] : memref<8x8x128xf32, #tpu.memory_space<vmem>>, vector<1x8x128xf32>
    %199 = vector.shape_cast %198 : vector<1x8x128xf32> to vector<8x128xf32>
    %cst_61 = arith.constant dense<0.000000e+00> : vector<8x128xf32>
    %200 = tpu.matmul %189, %3, %cst_61 {dimension_numbers = #tpu.dot_dimension_numbers<[1], [0], [0], [1], [0, 0, 1, 1], [], []>} : vector<8x32xf32>, vector<32x128xf32>, vector<8x128xf32> -> vector<8x128xf32>
    %201 = arith.addf %199, %200 : vector<8x128xf32>
    %202 = arith.negf %201 : vector<8x128xf32>
    %203 = math.exp %202 : vector<8x128xf32>
    %cst_62 = arith.constant 1.000000e+00 : f32
    %204 = vector.broadcast %cst_62 : f32 to vector<8x128xf32>
    %205 = arith.addf %204, %203 : vector<8x128xf32>
    %206 = arith.divf %204, %205 : vector<8x128xf32>
    %207 = vector.extract_strided_slice %206 {offsets = [0, 0], sizes = [8, 32], strides = [1, 1]} : vector<8x128xf32> to vector<8x32xf32>
    %208 = vector.extract_strided_slice %206 {offsets = [0, 32], sizes = [8, 32], strides = [1, 1]} : vector<8x128xf32> to vector<8x32xf32>
    %209 = vector.extract_strided_slice %206 {offsets = [0, 96], sizes = [8, 32], strides = [1, 1]} : vector<8x128xf32> to vector<8x32xf32>
    %210 = vector.extract_strided_slice %201 {offsets = [0, 64], sizes = [8, 32], strides = [1, 1]} : vector<8x128xf32> to vector<8x32xf32>
    %211 = math.tanh %210 : vector<8x32xf32>
    %212 = arith.mulf %208, %187 : vector<8x32xf32>
    %213 = arith.mulf %207, %211 : vector<8x32xf32>
    %214 = arith.addf %212, %213 : vector<8x32xf32>
    %215 = math.tanh %214 : vector<8x32xf32>
    %216 = arith.mulf %209, %215 : vector<8x32xf32>
    %cst_63 = arith.constant dense<0.000000e+00> : vector<8x128xf32>
    %217 = tpu.matmul %216, %4, %cst_63 {dimension_numbers = #tpu.dot_dimension_numbers<[1], [0], [0], [1], [0, 0, 1, 1], [], []>} : vector<8x32xf32>, vector<32x128xf32>, vector<8x128xf32> -> vector<8x128xf32>
    %218 = vector.broadcast %5 : vector<1x128xf32> to vector<8x128xf32>
    %219 = arith.addf %217, %218 : vector<8x128xf32>
    %220 = arith.index_cast %c7_i32 : i32 to index
    %c0_64 = arith.constant 0 : index
    %c0_65 = arith.constant 0 : index
    %221 = vector.load %arg7[%220, %c0_64, %c0_65] : memref<8x8x128xf32, #tpu.memory_space<vmem>>, vector<1x8x128xf32>
    %222 = vector.shape_cast %221 : vector<1x8x128xf32> to vector<8x128xf32>
    %223 = vector.shape_cast %219 : vector<8x128xf32> to vector<1x8x128xf32>
    tpu.vector_store %arg7[%220, %c0_64, %c0_65], %223 {strides = array<i32>} : memref<8x8x128xf32, #tpu.memory_space<vmem>>, vector<1x8x128xf32>,
    %c8_i32 = arith.constant 8 : i32
    %c0_66 = arith.constant 0 : index
    %c0_67 = arith.constant 0 : index
    %224 = vector.load %arg10[%c0_66, %c0_67] : memref<8x32xf32, #tpu.memory_space<vmem>>, vector<8x32xf32>
    tpu.vector_store %arg10[%c0_66, %c0_67], %216 {strides = array<i32>} : memref<8x32xf32, #tpu.memory_space<vmem>>, vector<8x32xf32>,
    %c0_68 = arith.constant 0 : index
    %c0_69 = arith.constant 0 : index
    %225 = vector.load %arg11[%c0_68, %c0_69] : memref<8x32xf32, #tpu.memory_space<vmem>>, vector<8x32xf32>
    tpu.vector_store %arg11[%c0_68, %c0_69], %214 {strides = array<i32>} : memref<8x32xf32, #tpu.memory_space<vmem>>, vector<8x32xf32>,
    %c0_i32_70 = arith.constant 0 : i32
    %226 = arith.cmpi eq, %arg0, %c0_i32_70 : i32
    %227 = arith.extui %226 : i1 to i32
    %c0_i32_71 = arith.constant 0 : i32
    %228 = arith.cmpi ne, %227, %c0_i32_71 : i32
    scf.if %228 {
      %c0_72 = arith.constant 0 : index
      %c0_73 = arith.constant 0 : index
      %229 = vector.load %arg8[%c0_72, %c0_73] : memref<8x32xf32, #tpu.memory_space<vmem>>, vector<8x32xf32>
      tpu.vector_store %arg8[%c0_72, %c0_73], %216 {strides = array<i32>} : memref<8x32xf32, #tpu.memory_space<vmem>>, vector<8x32xf32>,
      %c0_74 = arith.constant 0 : index
      %c0_75 = arith.constant 0 : index
      %230 = vector.load %arg9[%c0_74, %c0_75] : memref<8x32xf32, #tpu.memory_space<vmem>>, vector<8x32xf32>
      tpu.vector_store %arg9[%c0_74, %c0_75], %214 {strides = array<i32>} : memref<8x32xf32, #tpu.memory_space<vmem>>, vector<8x32xf32>,
    } else {
    }
    return
  }
  func.func @transform_0(%arg0: i32) -> (i32, i32, i32) {
    %c0_i32 = arith.constant 0 : i32
    %c0_i32_0 = arith.constant 0 : i32
    %c0_i32_1 = arith.constant 0 : i32
    return %arg0, %c0_i32, %c0_i32_0 : i32, i32, i32
  }
  func.func @transform_1(%arg0: i32) -> (i32, i32) {
    %c0_i32 = arith.constant 0 : i32
    %c0_i32_0 = arith.constant 0 : i32
    %c0_i32_1 = arith.constant 0 : i32
    return %c0_i32, %c0_i32_0 : i32, i32
  }
  func.func @transform_2(%arg0: i32) -> (i32, i32) {
    %c0_i32 = arith.constant 0 : i32
    %c0_i32_0 = arith.constant 0 : i32
    %c0_i32_1 = arith.constant 0 : i32
    return %c0_i32, %c0_i32_0 : i32, i32
  }
  func.func @transform_3(%arg0: i32) -> (i32, i32) {
    %c0_i32 = arith.constant 0 : i32
    %c0_i32_0 = arith.constant 0 : i32
    %c0_i32_1 = arith.constant 0 : i32
    return %c0_i32, %c0_i32_0 : i32, i32
  }
  func.func @transform_4(%arg0: i32) -> (i32, i32) {
    %c0_i32 = arith.constant 0 : i32
    %c0_i32_0 = arith.constant 0 : i32
    %c0_i32_1 = arith.constant 0 : i32
    return %c0_i32, %c0_i32_0 : i32, i32
  }
  func.func @transform_5(%arg0: i32) -> (i32, i32) {
    %c0_i32 = arith.constant 0 : i32
    %c0_i32_0 = arith.constant 0 : i32
    %c0_i32_1 = arith.constant 0 : i32
    return %c0_i32, %c0_i32_0 : i32, i32
  }
  func.func @transform_6(%arg0: i32) -> (i32, i32, i32) {
    %c0_i32 = arith.constant 0 : i32
    %c0_i32_0 = arith.constant 0 : i32
    %c0_i32_1 = arith.constant 0 : i32
    return %arg0, %c0_i32, %c0_i32_0 : i32, i32, i32
  }
  func.func @transform_7(%arg0: i32) -> (i32, i32) {
    %c0_i32 = arith.constant 0 : i32
    %c0_i32_0 = arith.constant 0 : i32
    %c0_i32_1 = arith.constant 0 : i32
    return %c0_i32, %c0_i32_0 : i32, i32
  }
  func.func @transform_8(%arg0: i32) -> (i32, i32) {
    %c0_i32 = arith.constant 0 : i32
    %c0_i32_0 = arith.constant 0 : i32
    %c0_i32_1 = arith.constant 0 : i32
    return %c0_i32, %c0_i32_0 : i32, i32
  }
}

</mosaic_0001>

<llo_original>
// kernel: tpu_custom_call.1
$region0: #{tpu_custom_call.1}
  #allocation0 [shape = 'u32[]', space=smem, size = 0x4, offset = 0x4, fixed_abs, tag = 'smem constant byte address 0x4 - core index']
  #allocation1 [shape = 'u32[144,128]{1,0:T(1,128)}', space=vmem, size = 0x12000, scoped, tag = 'internal scratch']
  #allocation2 [shape = 'f32[8,32]{1,0:T(8,128)}', space=vmem, size = 0x1000, scoped, tag = 'scratch operand']
  #allocation3 [shape = 'f32[8,32]{1,0:T(8,128)}', space=vmem, size = 0x1000, scoped, tag = 'scratch operand']
  %s0 = inlined_call_operand.hbm [shape: f32[8,8,128], index: 0, kind: input, shape index: {}]
  %s1 = inlined_call_operand.hbm [shape: f32[8,32], index: 1, kind: input, shape index: {}]
  %s2 = inlined_call_operand.hbm [shape: f32[8,32], index: 2, kind: input, shape index: {}]
  %s3 = inlined_call_operand.hbm [shape: f32[32,128], index: 3, kind: input, shape index: {}]
  %s4 = inlined_call_operand.hbm [shape: f32[32,128], index: 4, kind: input, shape index: {}]
  %s5 = inlined_call_operand.vmem [shape: f32[1,128], index: 5, kind: input, shape index: {}]
  %s6 = inlined_call_operand.hbm [shape: f32[8,8,128], index: 6, kind: output, shape index: {0}]
  %s7 = inlined_call_operand.hbm [shape: f32[8,32], index: 7, kind: output, shape index: {1}]
  %s8 = inlined_call_operand.hbm [shape: f32[8,32], index: 8, kind: output, shape index: {2}]
  %9 = xla_tuple %s6, %s7, %s8
  %s10 = sld [smem:[#allocation0]]
  $region78: #{tpu_custom_call.1} parent=0
    _
  %s12 = ssub.s32 1, %s10
  %s13 = scalar_select 0, %s12, %s10
  $region1: #{tpu_custom_call.1} parent=0
    #allocation4 [shape = 'u8[32768]{0}', space=vmem, size = 0x8000, scoped, tag = 'input window, operand 0, single buffered']
    #allocation5 [shape = 's32[1]{0}', space=sflag, size = 0x4, scoped, tag = 'scoped memory for tpu_custom_call.1']
    #allocation6 [shape = 's32[1]{0}', space=sflag, size = 0x4, scoped, tag = 'scoped memory for tpu_custom_call.1']
    #allocation7 [shape = 'u8[4096]{0}', space=vmem, size = 0x1000, scoped, tag = 'input window, operand 1, single buffered']
    #allocation8 [shape = 's32[1]{0}', space=sflag, size = 0x4, scoped, tag = 'scoped memory for tpu_custom_call.1']
    #allocation9 [shape = 'u8[4096]{0}', space=vmem, size = 0x1000, scoped, tag = 'input window, operand 2, single buffered']
    #allocation10 [shape = 'u8[16384]{0}', space=vmem, size = 0x4000, scoped, tag = 'input window, operand 3, single buffered']
    #allocation11 [shape = 's32[1]{0}', space=sflag, size = 0x4, scoped, tag = 'scoped memory for tpu_custom_call.1']
    #allocation12 [shape = 'u8[16384]{0}', space=vmem, size = 0x4000, scoped, tag = 'input window, operand 4, single buffered']
    #allocation13 [shape = 'u8[32768]{0}', space=vmem, size = 0x8000, scoped, tag = 'output window, operand 0, single buffered']
    #allocation14 [shape = 'u8[4096]{0}', space=vmem, size = 0x1000, scoped, tag = 'output window, operand 1, single buffered']
    #allocation15 [shape = 's32[1]{0}', space=sflag, size = 0x4, scoped, tag = 'scoped memory for tpu_custom_call.1']
    #allocation16 [shape = 'u8[4096]{0}', space=vmem, size = 0x1000, scoped, tag = 'output window, operand 2, single buffered']
    %14 = vsyncpa [#allocation5], 0
    %15 = vsyncpa [#allocation8], 0
    %16 = vsyncpa [#allocation11], 0
    %17 = vsyncpa [#allocation6], 0
    %18 = vsyncpa [#allocation15], 0
    // Predicated region
    $region2: #{tpu_custom_call.1} parent=1 // pred_check
      _
    $region3: #{tpu_custom_call.1} parent=1 // pred_check_branch
      %20 = sbr.rel (0) target = $region5
    $region4: #{tpu_custom_call.1} parent=1 // pred_region
      %s22 = ssub.s32 1024, 1024
      %23 = vsyncadd [#allocation5], %s22
      %s24 = sshll.u32 [#allocation4], 4
      %s25 = int_to_ptr.vmem [resolvable:$true] %s24
      %30 = dma.hbm_to_vmem [thread:$0]  %s0, 1024, %s25, [#allocation5], 128, 128, 8
    $region5: #{tpu_custom_call.1} parent=1 // pred_fallthru
      _
    // Predicated region
    $region6: #{tpu_custom_call.1} parent=1 // pred_check
      _
    $region7: #{tpu_custom_call.1} parent=1 // pred_check_branch
      %32 = sbr.rel (0) target = $region9
    $region8: #{tpu_custom_call.1} parent=1 // pred_region
      %s34 = ssub.s32 128, 128
      %35 = vsyncadd [#allocation8], %s34
      %s37 = sshll.u32 [#allocation7], 4
      %s38 = int_to_ptr.vmem [resolvable:$true] %s37
      %40 = dma.hbm_to_vmem [thread:$0]  %s1, 128, %s38, [#allocation8]
    $region9: #{tpu_custom_call.1} parent=1 // pred_fallthru
      _
    // Predicated region
    $region10: #{tpu_custom_call.1} parent=1 // pred_check
      _
    $region11: #{tpu_custom_call.1} parent=1 // pred_check_branch
      %42 = sbr.rel (0) target = $region13
    $region12: #{tpu_custom_call.1} parent=1 // pred_region
      %s44 = ssub.s32 128, 128
      %45 = vsyncadd [#allocation8], %s44
      %s47 = sshll.u32 [#allocation9], 4
      %s48 = int_to_ptr.vmem [resolvable:$true] %s47
      %50 = dma.hbm_to_vmem [thread:$0]  %s2, 128, %s48, [#allocation8]
    $region13: #{tpu_custom_call.1} parent=1 // pred_fallthru
      _
    // Predicated region
    $region14: #{tpu_custom_call.1} parent=1 // pred_check
      _
    $region15: #{tpu_custom_call.1} parent=1 // pred_check_branch
      %52 = sbr.rel (0) target = $region17
    $region16: #{tpu_custom_call.1} parent=1 // pred_region
      %s54 = ssub.s32 512, 512
      %55 = vsyncadd [#allocation11], %s54
      %s56 = sshll.u32 [#allocation10], 4
      %s57 = int_to_ptr.vmem [resolvable:$true] %s56
      %62 = dma.hbm_to_vmem [thread:$0]  %s3, 512, %s57, [#allocation11], 128, 128, 8
    $region17: #{tpu_custom_call.1} parent=1 // pred_fallthru
      _
    // Predicated region
    $region18: #{tpu_custom_call.1} parent=1 // pred_check
      _
    $region19: #{tpu_custom_call.1} parent=1 // pred_check_branch
      %64 = sbr.rel (0) target = $region21
    $region20: #{tpu_custom_call.1} parent=1 // pred_region
      %s66 = ssub.s32 512, 512
      %67 = vsyncadd [#allocation11], %s66
      %s68 = sshll.u32 [#allocation12], 4
      %s69 = int_to_ptr.vmem [resolvable:$true] %s68
      %74 = dma.hbm_to_vmem [thread:$0]  %s4, 512, %s69, [#allocation11], 128, 128, 8
    $region21: #{tpu_custom_call.1} parent=1 // pred_fallthru
      _
    // Predicated region
    $region22: #{tpu_custom_call.1} parent=1 // pred_check
      _
    $region23: #{tpu_custom_call.1} parent=1 // pred_check_branch
      %76 = sbr.rel (0) target = $region25
    $region24: #{tpu_custom_call.1} parent=1 // pred_region
      _
    $region25: #{tpu_custom_call.1} parent=1 // pred_fallthru
      _
    // Predicated region
    $region26: #{tpu_custom_call.1} parent=1 // pred_check
      _
    $region27: #{tpu_custom_call.1} parent=1 // pred_check_branch
      %78 = sbr.rel (0) target = $region29
    $region28: #{tpu_custom_call.1} parent=1 // pred_region
      %79 = dma.done [#allocation5], 1024
    $region29: #{tpu_custom_call.1} parent=1 // pred_fallthru
      _
    // Predicated region
    $region30: #{tpu_custom_call.1} parent=1 // pred_check
      _
    $region31: #{tpu_custom_call.1} parent=1 // pred_check_branch
      %81 = sbr.rel (0) target = $region33
    $region32: #{tpu_custom_call.1} parent=1 // pred_region
      %82 = dma.done [#allocation8], 128
    $region33: #{tpu_custom_call.1} parent=1 // pred_fallthru
      _
    // Predicated region
    $region34: #{tpu_custom_call.1} parent=1 // pred_check
      _
    $region35: #{tpu_custom_call.1} parent=1 // pred_check_branch
      %84 = sbr.rel (0) target = $region37
    $region36: #{tpu_custom_call.1} parent=1 // pred_region
      %85 = dma.done [#allocation8], 128
    $region37: #{tpu_custom_call.1} parent=1 // pred_fallthru
      _
    // Predicated region
    $region38: #{tpu_custom_call.1} parent=1 // pred_check
      _
    $region39: #{tpu_custom_call.1} parent=1 // pred_check_branch
      %87 = sbr.rel (0) target = $region41
    $region40: #{tpu_custom_call.1} parent=1 // pred_region
      %88 = dma.done [#allocation11], 512
    $region41: #{tpu_custom_call.1} parent=1 // pred_fallthru
      _
    // Predicated region
    $region42: #{tpu_custom_call.1} parent=1 // pred_check
      _
    $region43: #{tpu_custom_call.1} parent=1 // pred_check_branch
      %90 = sbr.rel (0) target = $region45
    $region44: #{tpu_custom_call.1} parent=1 // pred_region
      %91 = dma.done [#allocation11], 512
    $region45: #{tpu_custom_call.1} parent=1 // pred_fallthru
      _
    %p92 = scmp.eq.s32.totalorder 0, 0
    // Predicated region
    $region46: #{tpu_custom_call.1} parent=1 // pred_check
      %p93 = pneg %p92
    $region47: #{tpu_custom_call.1} parent=1 // pred_check_branch
      %95 = sbr.rel (%p93) target = $region49
    $region48: #{tpu_custom_call.1} parent=1 // pred_region
      %v96 = vld [vmem:[#allocation7] sm:$0xff]
      %vm97 = vcmask 261120
      %98 = vst.msk [vmem:[#allocation2] sm:$0xff] %vm97, %v96
      %v99 = vld [vmem:[#allocation9] sm:$0xff]
      %100 = vst.msk [vmem:[#allocation3] sm:$0xff] %vm97, %v99
    $region49: #{tpu_custom_call.1} parent=1 // pred_fallthru
      _
    %v101 = vld [vmem:[#allocation10] sm:$0xff]
    %v102 = vld [vmem:[#allocation10 + $0x8] sm:$0xff]
    %v103 = vld [vmem:[#allocation10 + $0x10] sm:$0xff]
    %v104 = vld [vmem:[#allocation10 + $0x18] sm:$0xff]
    %v105 = vld [vmem:[#allocation12] sm:$0xff]
    %v106 = vld [vmem:[#allocation12 + $0x8] sm:$0xff]
    %v107 = vld [vmem:[#allocation12 + $0x10] sm:$0xff]
    %v108 = vld [vmem:[#allocation12 + $0x18] sm:$0xff]
    %v109 = vld [vmem:[%s5] sm:$0x1]
    %v110 = vld [vmem:[#allocation2] sm:$0xff]
    %v111 = vld [vmem:[#allocation3] sm:$0xff]
    %v112 = vld [vmem:[#allocation4] sm:$0xff]
    %vm113 = vcmask 261120
    %v115 = vsel %vm113, %v110, 0
    %117 = vmatprep.subr.mxu0 0.0
    %118 = vmatpush1.msra.mxu0 %v101
    %119 = vmatprep.subr.mxu0 0.0
    %120 = vmatpush1.msra.mxu0 %v102
    %121 = vmatprep.subr.mxu0 0.0
    %122 = vmatpush1.msra.mxu0 %v103
    %123 = vmatprep.subr.mxu0 0.0
    %124 = vmatpush1.msra.mxu0 %v104
    %125 = vmatprep.subr.mxu0 0.0
    %126 = vmatpush1.msra.mxu0 0.0
    %127 = vmatprep.subr.mxu0 0.0
    %128 = vmatpush1.msra.mxu0 0.0
    %129 = vmatprep.subr.mxu0 0.0
    %130 = vmatpush1.msra.mxu0 0.0
    %131 = vmatprep.subr.mxu0 0.0
    %132 = vmatpush1.msra.mxu0 0.0
    %133 = vmatprep.subr.mxu0 0.0
    %134 = vmatpush1.msra.mxu0 0.0
    %135 = vmatprep.subr.mxu0 0.0
    %136 = vmatpush1.msra.mxu0 0.0
    %137 = vmatprep.subr.mxu0 0.0
    %138 = vmatpush1.msra.mxu0 0.0
    %139 = vmatprep.subr.mxu0 0.0
    %140 = vmatpush1.msra.mxu0 0.0
    %141 = vmatprep.subr.mxu0 0.0
    %142 = vmatpush1.msra.mxu0 0.0
    %143 = vmatprep.subr.mxu0 0.0
    %144 = vmatpush1.msra.mxu0 0.0
    %145 = vmatprep.subr.mxu0 0.0
    %146 = vmatpush1.msra.mxu0 0.0
    %147 = vmatprep.subr.mxu0 0.0
    %148 = vmatpush1.msra.mxu0 0.0
    %149 = vmatprep.subr.mxu0 0.0
    %150 = vmatpush1.msra.mxu0 0.0
    %151 = vmatprep.subr.mxu0 0.0
    %152 = vmatpush1.msra.mxu0 0.0
    %153 = vmatprep.subr.mxu0 0.0
    %154 = vmatpush1.msra.mxu0 0.0
    %155 = vmatprep.subr.mxu0 0.0
    %156 = vmatpush1.msra.mxu0 0.0
    %157 = vmatprep.subr.mxu0 0.0
    %158 = vmatpush1.msra.mxu0 0.0
    %159 = vmatprep.subr.mxu0 0.0
    %160 = vmatpush1.msra.mxu0 0.0
    %161 = vmatprep.subr.mxu0 0.0
    %162 = vmatpush1.msra.mxu0 0.0
    %163 = vmatprep.subr.mxu0 0.0
    %164 = vmatpush1.msra.mxu0 0.0
    %165 = vmatprep.subr.mxu0 0.0
    %166 = vmatpush1.msra.mxu0 0.0
    %167 = vmatprep.subr.mxu0 0.0
    %168 = vmatpush1.msra.mxu0 0.0
    %169 = vmatprep.subr.mxu0 0.0
    %170 = vmatpush1.msra.mxu0 0.0
    %171 = vmatprep.subr.mxu0 0.0
    %172 = vmatpush1.msra.mxu0 0.0
    %173 = vmatprep.subr.mxu0 0.0
    %174 = vmatpush1.msra.mxu0 0.0
    %175 = vmatprep.subr.mxu0 0.0
    %176 = vmatpush1.msra.mxu0 0.0
    %177 = vmatprep.subr.mxu0 0.0
    %178 = vmatpush1.msra.mxu0 0.0
    %179 = vmatprep.subr.mxu0 0.0
    %180 = vmatpush1.msra.mxu0 0.0
    %181 = vmatprep.mubr.f32.mxu0 0.0
    %182 = vmatmul.mubr.f32.gmra.mrb[0].mxu0 %v115
    %v183 = vpop.f32.mrb[0].mxu0
    %v184 = vadd.f32 0.0, %v183
    %v185 = vpop.f32.mrb[0].mxu0
    %186 = vdwg.mxu0
    %v187 = vadd.f32 %v112, %v184
    %v188 = vxor.u32 %v187, 2147483648
    %v189 = vmul.f32 %v188, 1.442695
    %v190 = vpow.pop %v189
    %v191 = vadd.f32 %v190, 1.0
    %v192 = vrcp.pop %v191
    %v193 = vmul.f32 1.0, %v192
    %v194 = vtanh.pop %v187
    %196 = vrot.lane.b32.xlu0 %v111, 32
    %v197 = vpop.permute.xlu0 %196
    %v199 = vmul.f32 %v193, %v197
    %201 = vrot.lane.b32.xlu0 %v194, 64
    %v202 = vpop.permute.xlu0 %201
    %v204 = vmul.f32 %v193, %v202
    %206 = vrot.lane.b32.xlu0 %v204, 32
    %v207 = vpop.permute.xlu0 %206
    %v209 = vadd.f32 %v199, %v207
    %v210 = vtanh.pop %v209
    %212 = vrot.lane.b32.xlu0 %v210, 64
    %v213 = vpop.permute.xlu0 %212
    %v215 = vmul.f32 %v193, %v213
    %v217 = vlaneseq
    %v218 = vshrl.u32 %v217, 7
    %v219 = vsub.s32 0, %v218
    %v220 = vrot.slane %v109, %v219
    %223 = vrot.lane.b32.xlu0 %v215, 32
    %v224 = vpop.permute.xlu0 %223
    %v225 = vsel %vm113, %v224, 0
    %227 = vmatprep.subr.mxu0 0.0
    %228 = vmatpush1.msra.mxu0 %v105
    %229 = vmatprep.subr.mxu0 0.0
    %230 = vmatpush1.msra.mxu0 %v106
    %231 = vmatprep.subr.mxu0 0.0
    %232 = vmatpush1.msra.mxu0 %v107
    %233 = vmatprep.subr.mxu0 0.0
    %234 = vmatpush1.msra.mxu0 %v108
    %235 = vmatprep.subr.mxu0 0.0
    %236 = vmatpush1.msra.mxu0 0.0
    %237 = vmatprep.subr.mxu0 0.0
    %238 = vmatpush1.msra.mxu0 0.0
    %239 = vmatprep.subr.mxu0 0.0
    %240 = vmatpush1.msra.mxu0 0.0
    %241 = vmatprep.subr.mxu0 0.0
    %242 = vmatpush1.msra.mxu0 0.0
    %243 = vmatprep.subr.mxu0 0.0
    %244 = vmatpush1.msra.mxu0 0.0
    %245 = vmatprep.subr.mxu0 0.0
    %246 = vmatpush1.msra.mxu0 0.0
    %247 = vmatprep.subr.mxu0 0.0
    %248 = vmatpush1.msra.mxu0 0.0
    %249 = vmatprep.subr.mxu0 0.0
    %250 = vmatpush1.msra.mxu0 0.0
    %251 = vmatprep.subr.mxu0 0.0
    %252 = vmatpush1.msra.mxu0 0.0
    %253 = vmatprep.subr.mxu0 0.0
    %254 = vmatpush1.msra.mxu0 0.0
    %255 = vmatprep.subr.mxu0 0.0
    %256 = vmatpush1.msra.mxu0 0.0
    %257 = vmatprep.subr.mxu0 0.0
    %258 = vmatpush1.msra.mxu0 0.0
    %259 = vmatprep.subr.mxu0 0.0
    %260 = vmatpush1.msra.mxu0 0.0
    %261 = vmatprep.subr.mxu0 0.0
    %262 = vmatpush1.msra.mxu0 0.0
    %263 = vmatprep.subr.mxu0 0.0
    %264 = vmatpush1.msra.mxu0 0.0
    %265 = vmatprep.subr.mxu0 0.0
    %266 = vmatpush1.msra.mxu0 0.0
    %267 = vmatprep.subr.mxu0 0.0
    %268 = vmatpush1.msra.mxu0 0.0
    %269 = vmatprep.subr.mxu0 0.0
    %270 = vmatpush1.msra.mxu0 0.0
    %271 = vmatprep.subr.mxu0 0.0
    %272 = vmatpush1.msra.mxu0 0.0
    %273 = vmatprep.subr.mxu0 0.0
    %274 = vmatpush1.msra.mxu0 0.0
    %275 = vmatprep.subr.mxu0 0.0
    %276 = vmatpush1.msra.mxu0 0.0
    %277 = vmatprep.subr.mxu0 0.0
    %278 = vmatpush1.msra.mxu0 0.0
    %279 = vmatprep.subr.mxu0 0.0
    %280 = vmatpush1.msra.mxu0 0.0
    %281 = vmatprep.subr.mxu0 0.0
    %282 = vmatpush1.msra.mxu0 0.0
    %283 = vmatprep.subr.mxu0 0.0
    %284 = vmatpush1.msra.mxu0 0.0
    %285 = vmatprep.subr.mxu0 0.0
    %286 = vmatpush1.msra.mxu0 0.0
    %287 = vmatprep.subr.mxu0 0.0
    %288 = vmatpush1.msra.mxu0 0.0
    %289 = vmatprep.subr.mxu0 0.0
    %290 = vmatpush1.msra.mxu0 0.0
    %291 = vmatprep.mubr.f32.mxu0 0.0
    %292 = vmatmul.mubr.f32.gmra.mrb[0].mxu0 %v225
    %v293 = vpop.f32.mrb[0].mxu0
    %v294 = vadd.f32 %v220, %v293
    %v295 = vpop.f32.mrb[0].mxu0
    %296 = vdwg.mxu0
    %297 = vst [vmem:[#allocation13] sm:$0xff] %v294
    %s298 = scalar_lea.vmem [#allocation4], 8
    %v299 = vld [vmem:[%s298] sm:$0xff]
    %300 = vmatprep.subr.mxu0 0.0
    %301 = vmatpush1.msra.mxu0 %v101
    %302 = vmatprep.subr.mxu0 0.0
    %303 = vmatpush1.msra.mxu0 %v102
    %304 = vmatprep.subr.mxu0 0.0
    %305 = vmatpush1.msra.mxu0 %v103
    %306 = vmatprep.subr.mxu0 0.0
    %307 = vmatpush1.msra.mxu0 %v104
    %308 = vmatprep.subr.mxu0 0.0
    %309 = vmatpush1.msra.mxu0 0.0
    %310 = vmatprep.subr.mxu0 0.0
    %311 = vmatpush1.msra.mxu0 0.0
    %312 = vmatprep.subr.mxu0 0.0
    %313 = vmatpush1.msra.mxu0 0.0
    %314 = vmatprep.subr.mxu0 0.0
    %315 = vmatpush1.msra.mxu0 0.0
    %316 = vmatprep.subr.mxu0 0.0
    %317 = vmatpush1.msra.mxu0 0.0
    %318 = vmatprep.subr.mxu0 0.0
    %319 = vmatpush1.msra.mxu0 0.0
    %320 = vmatprep.subr.mxu0 0.0
    %321 = vmatpush1.msra.mxu0 0.0
    %322 = vmatprep.subr.mxu0 0.0
    %323 = vmatpush1.msra.mxu0 0.0
    %324 = vmatprep.subr.mxu0 0.0
    %325 = vmatpush1.msra.mxu0 0.0
    %326 = vmatprep.subr.mxu0 0.0
    %327 = vmatpush1.msra.mxu0 0.0
    %328 = vmatprep.subr.mxu0 0.0
    %329 = vmatpush1.msra.mxu0 0.0
    %330 = vmatprep.subr.mxu0 0.0
    %331 = vmatpush1.msra.mxu0 0.0
    %332 = vmatprep.subr.mxu0 0.0
    %333 = vmatpush1.msra.mxu0 0.0
    %334 = vmatprep.subr.mxu0 0.0
    %335 = vmatpush1.msra.mxu0 0.0
    %336 = vmatprep.subr.mxu0 0.0
    %337 = vmatpush1.msra.mxu0 0.0
    %338 = vmatprep.subr.mxu0 0.0
    %339 = vmatpush1.msra.mxu0 0.0
    %340 = vmatprep.subr.mxu0 0.0
    %341 = vmatpush1.msra.mxu0 0.0
    %342 = vmatprep.subr.mxu0 0.0
    %343 = vmatpush1.msra.mxu0 0.0
    %344 = vmatprep.subr.mxu0 0.0
    %345 = vmatpush1.msra.mxu0 0.0
    %346 = vmatprep.subr.mxu0 0.0
    %347 = vmatpush1.msra.mxu0 0.0
    %348 = vmatprep.subr.mxu0 0.0
    %349 = vmatpush1.msra.mxu0 0.0
    %350 = vmatprep.subr.mxu0 0.0
    %351 = vmatpush1.msra.mxu0 0.0
    %352 = vmatprep.subr.mxu0 0.0
    %353 = vmatpush1.msra.mxu0 0.0
    %354 = vmatprep.subr.mxu0 0.0
    %355 = vmatpush1.msra.mxu0 0.0
    %356 = vmatprep.subr.mxu0 0.0
    %357 = vmatpush1.msra.mxu0 0.0
    %358 = vmatprep.subr.mxu0 0.0
    %359 = vmatpush1.msra.mxu0 0.0
    %360 = vmatprep.subr.mxu0 0.0
    %361 = vmatpush1.msra.mxu0 0.0
    %362 = vmatprep.subr.mxu0 0.0
    %363 = vmatpush1.msra.mxu0 0.0
    %364 = vmatprep.mubr.f32.mxu0 0.0
    %365 = vmatmul.mubr.f32.gmra.mrb[0].mxu0 %v225
    %v366 = vpop.f32.mrb[0].mxu0
    %v367 = vadd.f32 0.0, %v366
    %v368 = vpop.f32.mrb[0].mxu0
    %369 = vdwg.mxu0
    %v370 = vadd.f32 %v299, %v367
    %v371 = vxor.u32 %v370, 2147483648
    %v372 = vmul.f32 %v371, 1.442695
    %v373 = vpow.pop %v372
    %v374 = vadd.f32 %v373, 1.0
    %v375 = vrcp.pop %v374
    %v376 = vmul.f32 1.0, %v375
    %v377 = vtanh.pop %v370
    %v378 = vmul.f32 %v376, %v209
    %380 = vrot.lane.b32.xlu0 %v377, 64
    %v381 = vpop.permute.xlu0 %380
    %v383 = vmul.f32 %v376, %v381
    %385 = vrot.lane.b32.xlu0 %v383, 32
    %v386 = vpop.permute.xlu0 %385
    %v388 = vadd.f32 %v378, %v386
    %v389 = vtanh.pop %v388
    %391 = vrot.lane.b32.xlu0 %v389, 64
    %v392 = vpop.permute.xlu0 %391
    %v394 = vmul.f32 %v376, %v392
    %396 = vrot.lane.b32.xlu0 %v394, 32
    %v397 = vpop.permute.xlu0 %396
    %v398 = vsel %vm113, %v397, 0
    %400 = vmatprep.subr.mxu0 0.0
    %401 = vmatpush1.msra.mxu0 %v105
    %402 = vmatprep.subr.mxu0 0.0
    %403 = vmatpush1.msra.mxu0 %v106
    %404 = vmatprep.subr.mxu0 0.0
    %405 = vmatpush1.msra.mxu0 %v107
    %406 = vmatprep.subr.mxu0 0.0
    %407 = vmatpush1.msra.mxu0 %v108
    %408 = vmatprep.subr.mxu0 0.0
    %409 = vmatpush1.msra.mxu0 0.0
    %410 = vmatprep.subr.mxu0 0.0
    %411 = vmatpush1.msra.mxu0 0.0
    %412 = vmatprep.subr.mxu0 0.0
    %413 = vmatpush1.msra.mxu0 0.0
    %414 = vmatprep.subr.mxu0 0.0
    %415 = vmatpush1.msra.mxu0 0.0
    %416 = vmatprep.subr.mxu0 0.0
    %417 = vmatpush1.msra.mxu0 0.0
    %418 = vmatprep.subr.mxu0 0.0
    %419 = vmatpush1.msra.mxu0 0.0
    %420 = vmatprep.subr.mxu0 0.0
    %421 = vmatpush1.msra.mxu0 0.0
    %422 = vmatprep.subr.mxu0 0.0
    %423 = vmatpush1.msra.mxu0 0.0
    %424 = vmatprep.subr.mxu0 0.0
    %425 = vmatpush1.msra.mxu0 0.0
    %426 = vmatprep.subr.mxu0 0.0
    %427 = vmatpush1.msra.mxu0 0.0
    %428 = vmatprep.subr.mxu0 0.0
    %429 = vmatpush1.msra.mxu0 0.0
    %430 = vmatprep.subr.mxu0 0.0
    %431 = vmatpush1.msra.mxu0 0.0
    %432 = vmatprep.subr.mxu0 0.0
    %433 = vmatpush1.msra.mxu0 0.0
    %434 = vmatprep.subr.mxu0 0.0
    %435 = vmatpush1.msra.mxu0 0.0
    %436 = vmatprep.subr.mxu0 0.0
    %437 = vmatpush1.msra.mxu0 0.0
    %438 = vmatprep.subr.mxu0 0.0
    %439 = vmatpush1.msra.mxu0 0.0
    %440 = vmatprep.subr.mxu0 0.0
    %441 = vmatpush1.msra.mxu0 0.0
    %442 = vmatprep.subr.mxu0 0.0
    %443 = vmatpush1.msra.mxu0 0.0
    %444 = vmatprep.subr.mxu0 0.0
    %445 = vmatpush1.msra.mxu0 0.0
    %446 = vmatprep.subr.mxu0 0.0
    %447 = vmatpush1.msra.mxu0 0.0
    %448 = vmatprep.subr.mxu0 0.0
    %449 = vmatpush1.msra.mxu0 0.0
    %450 = vmatprep.subr.mxu0 0.0
    %451 = vmatpush1.msra.mxu0 0.0
    %452 = vmatprep.subr.mxu0 0.0
    %453 = vmatpush1.msra.mxu0 0.0
    %454 = vmatprep.subr.mxu0 0.0
    %455 = vmatpush1.msra.mxu0 0.0
    %456 = vmatprep.subr.mxu0 0.0
    %457 = vmatpush1.msra.mxu0 0.0
    %458 = vmatprep.subr.mxu0 0.0
    %459 = vmatpush1.msra.mxu0 0.0
    %460 = vmatprep.subr.mxu0 0.0
    %461 = vmatpush1.msra.mxu0 0.0
    %462 = vmatprep.subr.mxu0 0.0
    %463 = vmatpush1.msra.mxu0 0.0
    %464 = vmatprep.mubr.f32.mxu0 0.0
    %465 = vmatmul.mubr.f32.gmra.mrb[0].mxu0 %v398
    %v466 = vpop.f32.mrb[0].mxu0
    %v467 = vadd.f32 %v220, %v466
    %v468 = vpop.f32.mrb[0].mxu0
    %469 = vdwg.mxu0
    %s470 = scalar_lea.vmem [#allocation13], 8
    %471 = vst [vmem:[%s470] sm:$0xff] %v467
    %s472 = scalar_lea.vmem [#allocation4], 16
    %v473 = vld [vmem:[%s472] sm:$0xff]
    %474 = vmatprep.subr.mxu0 0.0
    %475 = vmatpush1.msra.mxu0 %v101
    %476 = vmatprep.subr.mxu0 0.0
    %477 = vmatpush1.msra.mxu0 %v102
    %478 = vmatprep.subr.mxu0 0.0
    %479 = vmatpush1.msra.mxu0 %v103
    %480 = vmatprep.subr.mxu0 0.0
    %481 = vmatpush1.msra.mxu0 %v104
    %482 = vmatprep.subr.mxu0 0.0
    %483 = vmatpush1.msra.mxu0 0.0
    %484 = vmatprep.subr.mxu0 0.0
    %485 = vmatpush1.msra.mxu0 0.0
    %486 = vmatprep.subr.mxu0 0.0
    %487 = vmatpush1.msra.mxu0 0.0
    %488 = vmatprep.subr.mxu0 0.0
    %489 = vmatpush1.msra.mxu0 0.0
    %490 = vmatprep.subr.mxu0 0.0
    %491 = vmatpush1.msra.mxu0 0.0
    %492 = vmatprep.subr.mxu0 0.0
    %493 = vmatpush1.msra.mxu0 0.0
    %494 = vmatprep.subr.mxu0 0.0
    %495 = vmatpush1.msra.mxu0 0.0
    %496 = vmatprep.subr.mxu0 0.0
    %497 = vmatpush1.msra.mxu0 0.0
    %498 = vmatprep.subr.mxu0 0.0
    %499 = vmatpush1.msra.mxu0 0.0
    %500 = vmatprep.subr.mxu0 0.0
    %501 = vmatpush1.msra.mxu0 0.0
    %502 = vmatprep.subr.mxu0 0.0
    %503 = vmatpush1.msra.mxu0 0.0
    %504 = vmatprep.subr.mxu0 0.0
    %505 = vmatpush1.msra.mxu0 0.0
    %506 = vmatprep.subr.mxu0 0.0
    %507 = vmatpush1.msra.mxu0 0.0
    %508 = vmatprep.subr.mxu0 0.0
    %509 = vmatpush1.msra.mxu0 0.0
    %510 = vmatprep.subr.mxu0 0.0
    %511 = vmatpush1.msra.mxu0 0.0
    %512 = vmatprep.subr.mxu0 0.0
    %513 = vmatpush1.msra.mxu0 0.0
    %514 = vmatprep.subr.mxu0 0.0
    %515 = vmatpush1.msra.mxu0 0.0
    %516 = vmatprep.subr.mxu0 0.0
    %517 = vmatpush1.msra.mxu0 0.0
    %518 = vmatprep.subr.mxu0 0.0
    %519 = vmatpush1.msra.mxu0 0.0
    %520 = vmatprep.subr.mxu0 0.0
    %521 = vmatpush1.msra.mxu0 0.0
    %522 = vmatprep.subr.mxu0 0.0
    %523 = vmatpush1.msra.mxu0 0.0
    %524 = vmatprep.subr.mxu0 0.0
    %525 = vmatpush1.msra.mxu0 0.0
    %526 = vmatprep.subr.mxu0 0.0
    %527 = vmatpush1.msra.mxu0 0.0
    %528 = vmatprep.subr.mxu0 0.0
    %529 = vmatpush1.msra.mxu0 0.0
    %530 = vmatprep.subr.mxu0 0.0
    %531 = vmatpush1.msra.mxu0 0.0
    %532 = vmatprep.subr.mxu0 0.0
    %533 = vmatpush1.msra.mxu0 0.0
    %534 = vmatprep.subr.mxu0 0.0
    %535 = vmatpush1.msra.mxu0 0.0
    %536 = vmatprep.subr.mxu0 0.0
    %537 = vmatpush1.msra.mxu0 0.0
    %538 = vmatprep.mubr.f32.mxu0 0.0
    %539 = vmatmul.mubr.f32.gmra.mrb[0].mxu0 %v398
    %v540 = vpop.f32.mrb[0].mxu0
    %v541 = vadd.f32 0.0, %v540
    %v542 = vpop.f32.mrb[0].mxu0
    %543 = vdwg.mxu0
    %v544 = vadd.f32 %v473, %v541
    %v545 = vxor.u32 %v544, 2147483648
    %v546 = vmul.f32 %v545, 1.442695
    %v547 = vpow.pop %v546
    %v548 = vadd.f32 %v547, 1.0
    %v549 = vrcp.pop %v548
    %v550 = vmul.f32 1.0, %v549
    %v551 = vtanh.pop %v544
    %v552 = vmul.f32 %v550, %v388
    %554 = vrot.lane.b32.xlu0 %v551, 64
    %v555 = vpop.permute.xlu0 %554
    %v557 = vmul.f32 %v550, %v555
    %559 = vrot.lane.b32.xlu0 %v557, 32
    %v560 = vpop.permute.xlu0 %559
    %v562 = vadd.f32 %v552, %v560
    %v563 = vtanh.pop %v562
    %565 = vrot.lane.b32.xlu0 %v563, 64
    %v566 = vpop.permute.xlu0 %565
    %v568 = vmul.f32 %v550, %v566
    %570 = vrot.lane.b32.xlu0 %v568, 32
    %v571 = vpop.permute.xlu0 %570
    %v572 = vsel %vm113, %v571, 0
    %574 = vmatprep.subr.mxu0 0.0
    %575 = vmatpush1.msra.mxu0 %v105
    %576 = vmatprep.subr.mxu0 0.0
    %577 = vmatpush1.msra.mxu0 %v106
    %578 = vmatprep.subr.mxu0 0.0
    %579 = vmatpush1.msra.mxu0 %v107
    %580 = vmatprep.subr.mxu0 0.0
    %581 = vmatpush1.msra.mxu0 %v108
    %582 = vmatprep.subr.mxu0 0.0
    %583 = vmatpush1.msra.mxu0 0.0
    %584 = vmatprep.subr.mxu0 0.0
    %585 = vmatpush1.msra.mxu0 0.0
    %586 = vmatprep.subr.mxu0 0.0
    %587 = vmatpush1.msra.mxu0 0.0
    %588 = vmatprep.subr.mxu0 0.0
    %589 = vmatpush1.msra.mxu0 0.0
    %590 = vmatprep.subr.mxu0 0.0
    %591 = vmatpush1.msra.mxu0 0.0
    %592 = vmatprep.subr.mxu0 0.0
    %593 = vmatpush1.msra.mxu0 0.0
    %594 = vmatprep.subr.mxu0 0.0
    %595 = vmatpush1.msra.mxu0 0.0
    %596 = vmatprep.subr.mxu0 0.0
    %597 = vmatpush1.msra.mxu0 0.0
    %598 = vmatprep.subr.mxu0 0.0
    %599 = vmatpush1.msra.mxu0 0.0
    %600 = vmatprep.subr.mxu0 0.0
    %601 = vmatpush1.msra.mxu0 0.0
    %602 = vmatprep.subr.mxu0 0.0
    %603 = vmatpush1.msra.mxu0 0.0
    %604 = vmatprep.subr.mxu0 0.0
    %605 = vmatpush1.msra.mxu0 0.0
    %606 = vmatprep.subr.mxu0 0.0
    %607 = vmatpush1.msra.mxu0 0.0
    %608 = vmatprep.subr.mxu0 0.0
    %609 = vmatpush1.msra.mxu0 0.0
    %610 = vmatprep.subr.mxu0 0.0
    %611 = vmatpush1.msra.mxu0 0.0
    %612 = vmatprep.subr.mxu0 0.0
    %613 = vmatpush1.msra.mxu0 0.0
    %614 = vmatprep.subr.mxu0 0.0
    %615 = vmatpush1.msra.mxu0 0.0
    %616 = vmatprep.subr.mxu0 0.0
    %617 = vmatpush1.msra.mxu0 0.0
    %618 = vmatprep.subr.mxu0 0.0
    %619 = vmatpush1.msra.mxu0 0.0
    %620 = vmatprep.subr.mxu0 0.0
    %621 = vmatpush1.msra.mxu0 0.0
    %622 = vmatprep.subr.mxu0 0.0
    %623 = vmatpush1.msra.mxu0 0.0
    %624 = vmatprep.subr.mxu0 0.0
    %625 = vmatpush1.msra.mxu0 0.0
    %626 = vmatprep.subr.mxu0 0.0
    %627 = vmatpush1.msra.mxu0 0.0
    %628 = vmatprep.subr.mxu0 0.0
    %629 = vmatpush1.msra.mxu0 0.0
    %630 = vmatprep.subr.mxu0 0.0
    %631 = vmatpush1.msra.mxu0 0.0
    %632 = vmatprep.subr.mxu0 0.0
    %633 = vmatpush1.msra.mxu0 0.0
    %634 = vmatprep.subr.mxu0 0.0
    %635 = vmatpush1.msra.mxu0 0.0
    %636 = vmatprep.subr.mxu0 0.0
    %637 = vmatpush1.msra.mxu0 0.0
    %638 = vmatprep.mubr.f32.mxu0 0.0
    %639 = vmatmul.mubr.f32.gmra.mrb[0].mxu0 %v572
    %v640 = vpop.f32.mrb[0].mxu0
    %v641 = vadd.f32 %v220, %v640
    %v642 = vpop.f32.mrb[0].mxu0
    %643 = vdwg.mxu0
    %s644 = scalar_lea.vmem [#allocation13], 16
    %645 = vst [vmem:[%s644] sm:$0xff] %v641
    %s646 = scalar_lea.vmem [#allocation4], 24
    %v647 = vld [vmem:[%s646] sm:$0xff]
    %648 = vmatprep.subr.mxu0 0.0
    %649 = vmatpush1.msra.mxu0 %v101
    %650 = vmatprep.subr.mxu0 0.0
    %651 = vmatpush1.msra.mxu0 %v102
    %652 = vmatprep.subr.mxu0 0.0
    %653 = vmatpush1.msra.mxu0 %v103
    %654 = vmatprep.subr.mxu0 0.0
    %655 = vmatpush1.msra.mxu0 %v104
    %656 = vmatprep.subr.mxu0 0.0
    %657 = vmatpush1.msra.mxu0 0.0
    %658 = vmatprep.subr.mxu0 0.0
    %659 = vmatpush1.msra.mxu0 0.0
    %660 = vmatprep.subr.mxu0 0.0
    %661 = vmatpush1.msra.mxu0 0.0
    %662 = vmatprep.subr.mxu0 0.0
    %663 = vmatpush1.msra.mxu0 0.0
    %664 = vmatprep.subr.mxu0 0.0
    %665 = vmatpush1.msra.mxu0 0.0
    %666 = vmatprep.subr.mxu0 0.0
    %667 = vmatpush1.msra.mxu0 0.0
    %668 = vmatprep.subr.mxu0 0.0
    %669 = vmatpush1.msra.mxu0 0.0
    %670 = vmatprep.subr.mxu0 0.0
    %671 = vmatpush1.msra.mxu0 0.0
    %672 = vmatprep.subr.mxu0 0.0
    %673 = vmatpush1.msra.mxu0 0.0
    %674 = vmatprep.subr.mxu0 0.0
    %675 = vmatpush1.msra.mxu0 0.0
    %676 = vmatprep.subr.mxu0 0.0
    %677 = vmatpush1.msra.mxu0 0.0
    %678 = vmatprep.subr.mxu0 0.0
    %679 = vmatpush1.msra.mxu0 0.0
    %680 = vmatprep.subr.mxu0 0.0
    %681 = vmatpush1.msra.mxu0 0.0
    %682 = vmatprep.subr.mxu0 0.0
    %683 = vmatpush1.msra.mxu0 0.0
    %684 = vmatprep.subr.mxu0 0.0
    %685 = vmatpush1.msra.mxu0 0.0
    %686 = vmatprep.subr.mxu0 0.0
    %687 = vmatpush1.msra.mxu0 0.0
    %688 = vmatprep.subr.mxu0 0.0
    %689 = vmatpush1.msra.mxu0 0.0
    %690 = vmatprep.subr.mxu0 0.0
    %691 = vmatpush1.msra.mxu0 0.0
    %692 = vmatprep.subr.mxu0 0.0
    %693 = vmatpush1.msra.mxu0 0.0
    %694 = vmatprep.subr.mxu0 0.0
    %695 = vmatpush1.msra.mxu0 0.0
    %696 = vmatprep.subr.mxu0 0.0
    %697 = vmatpush1.msra.mxu0 0.0
    %698 = vmatprep.subr.mxu0 0.0
    %699 = vmatpush1.msra.mxu0 0.0
    %700 = vmatprep.subr.mxu0 0.0
    %701 = vmatpush1.msra.mxu0 0.0
    %702 = vmatprep.subr.mxu0 0.0
    %703 = vmatpush1.msra.mxu0 0.0
    %704 = vmatprep.subr.mxu0 0.0
    %705 = vmatpush1.msra.mxu0 0.0
    %706 = vmatprep.subr.mxu0 0.0
    %707 = vmatpush1.msra.mxu0 0.0
    %708 = vmatprep.subr.mxu0 0.0
    %709 = vmatpush1.msra.mxu0 0.0
    %710 = vmatprep.subr.mxu0 0.0
    %711 = vmatpush1.msra.mxu0 0.0
    %712 = vmatprep.mubr.f32.mxu0 0.0
    %713 = vmatmul.mubr.f32.gmra.mrb[0].mxu0 %v572
    %v714 = vpop.f32.mrb[0].mxu0
    %v715 = vadd.f32 0.0, %v714
    %v716 = vpop.f32.mrb[0].mxu0
    %717 = vdwg.mxu0
    %v718 = vadd.f32 %v647, %v715
    %v719 = vxor.u32 %v718, 2147483648
    %v720 = vmul.f32 %v719, 1.442695
    %v721 = vpow.pop %v720
    %v722 = vadd.f32 %v721, 1.0
    %v723 = vrcp.pop %v722
    %v724 = vmul.f32 1.0, %v723
    %v725 = vtanh.pop %v718
    %v726 = vmul.f32 %v724, %v562
    %728 = vrot.lane.b32.xlu0 %v725, 64
    %v729 = vpop.permute.xlu0 %728
    %v731 = vmul.f32 %v724, %v729
    %733 = vrot.lane.b32.xlu0 %v731, 32
    %v734 = vpop.permute.xlu0 %733
    %v736 = vadd.f32 %v726, %v734
    %v737 = vtanh.pop %v736
    %739 = vrot.lane.b32.xlu0 %v737, 64
    %v740 = vpop.permute.xlu0 %739
    %v742 = vmul.f32 %v724, %v740
    %744 = vrot.lane.b32.xlu0 %v742, 32
    %v745 = vpop.permute.xlu0 %744
    %v746 = vsel %vm113, %v745, 0
    %748 = vmatprep.subr.mxu0 0.0
    %749 = vmatpush1.msra.mxu0 %v105
    %750 = vmatprep.subr.mxu0 0.0
    %751 = vmatpush1.msra.mxu0 %v106
    %752 = vmatprep.subr.mxu0 0.0
    %753 = vmatpush1.msra.mxu0 %v107
    %754 = vmatprep.subr.mxu0 0.0
    %755 = vmatpush1.msra.mxu0 %v108
    %756 = vmatprep.subr.mxu0 0.0
    %757 = vmatpush1.msra.mxu0 0.0
    %758 = vmatprep.subr.mxu0 0.0
    %759 = vmatpush1.msra.mxu0 0.0
    %760 = vmatprep.subr.mxu0 0.0
    %761 = vmatpush1.msra.mxu0 0.0
    %762 = vmatprep.subr.mxu0 0.0
    %763 = vmatpush1.msra.mxu0 0.0
    %764 = vmatprep.subr.mxu0 0.0
    %765 = vmatpush1.msra.mxu0 0.0
    %766 = vmatprep.subr.mxu0 0.0
    %767 = vmatpush1.msra.mxu0 0.0
    %768 = vmatprep.subr.mxu0 0.0
    %769 = vmatpush1.msra.mxu0 0.0
    %770 = vmatprep.subr.mxu0 0.0
    %771 = vmatpush1.msra.mxu0 0.0
    %772 = vmatprep.subr.mxu0 0.0
    %773 = vmatpush1.msra.mxu0 0.0
    %774 = vmatprep.subr.mxu0 0.0
    %775 = vmatpush1.msra.mxu0 0.0
    %776 = vmatprep.subr.mxu0 0.0
    %777 = vmatpush1.msra.mxu0 0.0
    %778 = vmatprep.subr.mxu0 0.0
    %779 = vmatpush1.msra.mxu0 0.0
    %780 = vmatprep.subr.mxu0 0.0
    %781 = vmatpush1.msra.mxu0 0.0
    %782 = vmatprep.subr.mxu0 0.0
    %783 = vmatpush1.msra.mxu0 0.0
    %784 = vmatprep.subr.mxu0 0.0
    %785 = vmatpush1.msra.mxu0 0.0
    %786 = vmatprep.subr.mxu0 0.0
    %787 = vmatpush1.msra.mxu0 0.0
    %788 = vmatprep.subr.mxu0 0.0
    %789 = vmatpush1.msra.mxu0 0.0
    %790 = vmatprep.subr.mxu0 0.0
    %791 = vmatpush1.msra.mxu0 0.0
    %792 = vmatprep.subr.mxu0 0.0
    %793 = vmatpush1.msra.mxu0 0.0
    %794 = vmatprep.subr.mxu0 0.0
    %795 = vmatpush1.msra.mxu0 0.0
    %796 = vmatprep.subr.mxu0 0.0
    %797 = vmatpush1.msra.mxu0 0.0
    %798 = vmatprep.subr.mxu0 0.0
    %799 = vmatpush1.msra.mxu0 0.0
    %800 = vmatprep.subr.mxu0 0.0
    %801 = vmatpush1.msra.mxu0 0.0
    %802 = vmatprep.subr.mxu0 0.0
    %803 = vmatpush1.msra.mxu0 0.0
    %804 = vmatprep.subr.mxu0 0.0
    %805 = vmatpush1.msra.mxu0 0.0
    %806 = vmatprep.subr.mxu0 0.0
    %807 = vmatpush1.msra.mxu0 0.0
    %808 = vmatprep.subr.mxu0 0.0
    %809 = vmatpush1.msra.mxu0 0.0
    %810 = vmatprep.subr.mxu0 0.0
    %811 = vmatpush1.msra.mxu0 0.0
    %812 = vmatprep.mubr.f32.mxu0 0.0
    %813 = vmatmul.mubr.f32.gmra.mrb[0].mxu0 %v746
    %v814 = vpop.f32.mrb[0].mxu0
    %v815 = vadd.f32 %v220, %v814
    %v816 = vpop.f32.mrb[0].mxu0
    %817 = vdwg.mxu0
    %s818 = scalar_lea.vmem [#allocation13], 24
    %819 = vst [vmem:[%s818] sm:$0xff] %v815
    %s820 = scalar_lea.vmem [#allocation4], 32
    %v821 = vld [vmem:[%s820] sm:$0xff]
    %822 = vmatprep.subr.mxu0 0.0
    %823 = vmatpush1.msra.mxu0 %v101
    %824 = vmatprep.subr.mxu0 0.0
    %825 = vmatpush1.msra.mxu0 %v102
    %826 = vmatprep.subr.mxu0 0.0
    %827 = vmatpush1.msra.mxu0 %v103
    %828 = vmatprep.subr.mxu0 0.0
    %829 = vmatpush1.msra.mxu0 %v104
    %830 = vmatprep.subr.mxu0 0.0
    %831 = vmatpush1.msra.mxu0 0.0
    %832 = vmatprep.subr.mxu0 0.0
    %833 = vmatpush1.msra.mxu0 0.0
    %834 = vmatprep.subr.mxu0 0.0
    %835 = vmatpush1.msra.mxu0 0.0
    %836 = vmatprep.subr.mxu0 0.0
    %837 = vmatpush1.msra.mxu0 0.0
    %838 = vmatprep.subr.mxu0 0.0
    %839 = vmatpush1.msra.mxu0 0.0
    %840 = vmatprep.subr.mxu0 0.0
    %841 = vmatpush1.msra.mxu0 0.0
    %842 = vmatprep.subr.mxu0 0.0
    %843 = vmatpush1.msra.mxu0 0.0
    %844 = vmatprep.subr.mxu0 0.0
    %845 = vmatpush1.msra.mxu0 0.0
    %846 = vmatprep.subr.mxu0 0.0
    %847 = vmatpush1.msra.mxu0 0.0
    %848 = vmatprep.subr.mxu0 0.0
    %849 = vmatpush1.msra.mxu0 0.0
    %850 = vmatprep.subr.mxu0 0.0
    %851 = vmatpush1.msra.mxu0 0.0
    %852 = vmatprep.subr.mxu0 0.0
    %853 = vmatpush1.msra.mxu0 0.0
    %854 = vmatprep.subr.mxu0 0.0
    %855 = vmatpush1.msra.mxu0 0.0
    %856 = vmatprep.subr.mxu0 0.0
    %857 = vmatpush1.msra.mxu0 0.0
    %858 = vmatprep.subr.mxu0 0.0
    %859 = vmatpush1.msra.mxu0 0.0
    %860 = vmatprep.subr.mxu0 0.0
    %861 = vmatpush1.msra.mxu0 0.0
    %862 = vmatprep.subr.mxu0 0.0
    %863 = vmatpush1.msra.mxu0 0.0
    %864 = vmatprep.subr.mxu0 0.0
    %865 = vmatpush1.msra.mxu0 0.0
    %866 = vmatprep.subr.mxu0 0.0
    %867 = vmatpush1.msra.mxu0 0.0
    %868 = vmatprep.subr.mxu0 0.0
    %869 = vmatpush1.msra.mxu0 0.0
    %870 = vmatprep.subr.mxu0 0.0
    %871 = vmatpush1.msra.mxu0 0.0
    %872 = vmatprep.subr.mxu0 0.0
    %873 = vmatpush1.msra.mxu0 0.0
    %874 = vmatprep.subr.mxu0 0.0
    %875 = vmatpush1.msra.mxu0 0.0
    %876 = vmatprep.subr.mxu0 0.0
    %877 = vmatpush1.msra.mxu0 0.0
    %878 = vmatprep.subr.mxu0 0.0
    %879 = vmatpush1.msra.mxu0 0.0
    %880 = vmatprep.subr.mxu0 0.0
    %881 = vmatpush1.msra.mxu0 0.0
    %882 = vmatprep.subr.mxu0 0.0
    %883 = vmatpush1.msra.mxu0 0.0
    %884 = vmatprep.subr.mxu0 0.0
    %885 = vmatpush1.msra.mxu0 0.0
    %886 = vmatprep.mubr.f32.mxu0 0.0
    %887 = vmatmul.mubr.f32.gmra.mrb[0].mxu0 %v746
    %v888 = vpop.f32.mrb[0].mxu0
    %v889 = vadd.f32 0.0, %v888
    %v890 = vpop.f32.mrb[0].mxu0
    %891 = vdwg.mxu0
    %v892 = vadd.f32 %v821, %v889
    %v893 = vxor.u32 %v892, 2147483648
    %v894 = vmul.f32 %v893, 1.442695
    %v895 = vpow.pop %v894
    %v896 = vadd.f32 %v895, 1.0
    %v897 = vrcp.pop %v896
    %v898 = vmul.f32 1.0, %v897
    %v899 = vtanh.pop %v892
    %v900 = vmul.f32 %v898, %v736
    %902 = vrot.lane.b32.xlu0 %v899, 64
    %v903 = vpop.permute.xlu0 %902
    %v905 = vmul.f32 %v898, %v903
    %907 = vrot.lane.b32.xlu0 %v905, 32
    %v908 = vpop.permute.xlu0 %907
    %v910 = vadd.f32 %v900, %v908
    %v911 = vtanh.pop %v910
    %913 = vrot.lane.b32.xlu0 %v911, 64
    %v914 = vpop.permute.xlu0 %913
    %v916 = vmul.f32 %v898, %v914
    %918 = vrot.lane.b32.xlu0 %v916, 32
    %v919 = vpop.permute.xlu0 %918
    %v920 = vsel %vm113, %v919, 0
    %922 = vmatprep.subr.mxu0 0.0
    %923 = vmatpush1.msra.mxu0 %v105
    %924 = vmatprep.subr.mxu0 0.0
    %925 = vmatpush1.msra.mxu0 %v106
    %926 = vmatprep.subr.mxu0 0.0
    %927 = vmatpush1.msra.mxu0 %v107
    %928 = vmatprep.subr.mxu0 0.0
    %929 = vmatpush1.msra.mxu0 %v108
    %930 = vmatprep.subr.mxu0 0.0
    %931 = vmatpush1.msra.mxu0 0.0
    %932 = vmatprep.subr.mxu0 0.0
    %933 = vmatpush1.msra.mxu0 0.0
    %934 = vmatprep.subr.mxu0 0.0
    %935 = vmatpush1.msra.mxu0 0.0
    %936 = vmatprep.subr.mxu0 0.0
    %937 = vmatpush1.msra.mxu0 0.0
    %938 = vmatprep.subr.mxu0 0.0
    %939 = vmatpush1.msra.mxu0 0.0
    %940 = vmatprep.subr.mxu0 0.0
    %941 = vmatpush1.msra.mxu0 0.0
    %942 = vmatprep.subr.mxu0 0.0
    %943 = vmatpush1.msra.mxu0 0.0
    %944 = vmatprep.subr.mxu0 0.0
    %945 = vmatpush1.msra.mxu0 0.0
    %946 = vmatprep.subr.mxu0 0.0
    %947 = vmatpush1.msra.mxu0 0.0
    %948 = vmatprep.subr.mxu0 0.0
    %949 = vmatpush1.msra.mxu0 0.0
    %950 = vmatprep.subr.mxu0 0.0
    %951 = vmatpush1.msra.mxu0 0.0
    %952 = vmatprep.subr.mxu0 0.0
    %953 = vmatpush1.msra.mxu0 0.0
    %954 = vmatprep.subr.mxu0 0.0
    %955 = vmatpush1.msra.mxu0 0.0
    %956 = vmatprep.subr.mxu0 0.0
    %957 = vmatpush1.msra.mxu0 0.0
    %958 = vmatprep.subr.mxu0 0.0
    %959 = vmatpush1.msra.mxu0 0.0
    %960 = vmatprep.subr.mxu0 0.0
    %961 = vmatpush1.msra.mxu0 0.0
    %962 = vmatprep.subr.mxu0 0.0
    %963 = vmatpush1.msra.mxu0 0.0
    %964 = vmatprep.subr.mxu0 0.0
    %965 = vmatpush1.msra.mxu0 0.0
    %966 = vmatprep.subr.mxu0 0.0
    %967 = vmatpush1.msra.mxu0 0.0
    %968 = vmatprep.subr.mxu0 0.0
    %969 = vmatpush1.msra.mxu0 0.0
    %970 = vmatprep.subr.mxu0 0.0
    %971 = vmatpush1.msra.mxu0 0.0
    %972 = vmatprep.subr.mxu0 0.0
    %973 = vmatpush1.msra.mxu0 0.0
    %974 = vmatprep.subr.mxu0 0.0
    %975 = vmatpush1.msra.mxu0 0.0
    %976 = vmatprep.subr.mxu0 0.0
    %977 = vmatpush1.msra.mxu0 0.0
    %978 = vmatprep.subr.mxu0 0.0
    %979 = vmatpush1.msra.mxu0 0.0
    %980 = vmatprep.subr.mxu0 0.0
    %981 = vmatpush1.msra.mxu0 0.0
    %982 = vmatprep.subr.mxu0 0.0
    %983 = vmatpush1.msra.mxu0 0.0
    %984 = vmatprep.subr.mxu0 0.0
    %985 = vmatpush1.msra.mxu0 0.0
    %986 = vmatprep.mubr.f32.mxu0 0.0
    %987 = vmatmul.mubr.f32.gmra.mrb[0].mxu0 %v920
    %v988 = vpop.f32.mrb[0].mxu0
    %v989 = vadd.f32 %v220, %v988
    %v990 = vpop.f32.mrb[0].mxu0
    %991 = vdwg.mxu0
    %s992 = scalar_lea.vmem [#allocation13], 32
    %993 = vst [vmem:[%s992] sm:$0xff] %v989
    %s994 = scalar_lea.vmem [#allocation4], 40
    %v995 = vld [vmem:[%s994] sm:$0xff]
    %996 = vmatprep.subr.mxu0 0.0
    %997 = vmatpush1.msra.mxu0 %v101
    %998 = vmatprep.subr.mxu0 0.0
    %999 = vmatpush1.msra.mxu0 %v102
    %1000 = vmatprep.subr.mxu0 0.0
    %1001 = vmatpush1.msra.mxu0 %v103
    %1002 = vmatprep.subr.mxu0 0.0
    %1003 = vmatpush1.msra.mxu0 %v104
    %1004 = vmatprep.subr.mxu0 0.0
    %1005 = vmatpush1.msra.mxu0 0.0
    %1006 = vmatprep.subr.mxu0 0.0
    %1007 = vmatpush1.msra.mxu0 0.0
    %1008 = vmatprep.subr.mxu0 0.0
    %1009 = vmatpush1.msra.mxu0 0.0
    %1010 = vmatprep.subr.mxu0 0.0
    %1011 = vmatpush1.msra.mxu0 0.0
    %1012 = vmatprep.subr.mxu0 0.0
    %1013 = vmatpush1.msra.mxu0 0.0
    %1014 = vmatprep.subr.mxu0 0.0
    %1015 = vmatpush1.msra.mxu0 0.0
    %1016 = vmatprep.subr.mxu0 0.0
    %1017 = vmatpush1.msra.mxu0 0.0
    %1018 = vmatprep.subr.mxu0 0.0
    %1019 = vmatpush1.msra.mxu0 0.0
    %1020 = vmatprep.subr.mxu0 0.0
    %1021 = vmatpush1.msra.mxu0 0.0
    %1022 = vmatprep.subr.mxu0 0.0
    %1023 = vmatpush1.msra.mxu0 0.0
    %1024 = vmatprep.subr.mxu0 0.0
    %1025 = vmatpush1.msra.mxu0 0.0
    %1026 = vmatprep.subr.mxu0 0.0
    %1027 = vmatpush1.msra.mxu0 0.0
    %1028 = vmatprep.subr.mxu0 0.0
    %1029 = vmatpush1.msra.mxu0 0.0
    %1030 = vmatprep.subr.mxu0 0.0
    %1031 = vmatpush1.msra.mxu0 0.0
    %1032 = vmatprep.subr.mxu0 0.0
    %1033 = vmatpush1.msra.mxu0 0.0
    %1034 = vmatprep.subr.mxu0 0.0
    %1035 = vmatpush1.msra.mxu0 0.0
    %1036 = vmatprep.subr.mxu0 0.0
    %1037 = vmatpush1.msra.mxu0 0.0
    %1038 = vmatprep.subr.mxu0 0.0
    %1039 = vmatpush1.msra.mxu0 0.0
    %1040 = vmatprep.subr.mxu0 0.0
    %1041 = vmatpush1.msra.mxu0 0.0
    %1042 = vmatprep.subr.mxu0 0.0
    %1043 = vmatpush1.msra.mxu0 0.0
    %1044 = vmatprep.subr.mxu0 0.0
    %1045 = vmatpush1.msra.mxu0 0.0
    %1046 = vmatprep.subr.mxu0 0.0
    %1047 = vmatpush1.msra.mxu0 0.0
    %1048 = vmatprep.subr.mxu0 0.0
    %1049 = vmatpush1.msra.mxu0 0.0
    %1050 = vmatprep.subr.mxu0 0.0
    %1051 = vmatpush1.msra.mxu0 0.0
    %1052 = vmatprep.subr.mxu0 0.0
    %1053 = vmatpush1.msra.mxu0 0.0
    %1054 = vmatprep.subr.mxu0 0.0
    %1055 = vmatpush1.msra.mxu0 0.0
    %1056 = vmatprep.subr.mxu0 0.0
    %1057 = vmatpush1.msra.mxu0 0.0
    %1058 = vmatprep.subr.mxu0 0.0
    %1059 = vmatpush1.msra.mxu0 0.0
    %1060 = vmatprep.mubr.f32.mxu0 0.0
    %1061 = vmatmul.mubr.f32.gmra.mrb[0].mxu0 %v920
    %v1062 = vpop.f32.mrb[0].mxu0
    %v1063 = vadd.f32 0.0, %v1062
    %v1064 = vpop.f32.mrb[0].mxu0
    %1065 = vdwg.mxu0
    %v1066 = vadd.f32 %v995, %v1063
    %v1067 = vxor.u32 %v1066, 2147483648
    %v1068 = vmul.f32 %v1067, 1.442695
    %v1069 = vpow.pop %v1068
    %v1070 = vadd.f32 %v1069, 1.0
    %v1071 = vrcp.pop %v1070
    %v1072 = vmul.f32 1.0, %v1071
    %v1073 = vtanh.pop %v1066
    %v1074 = vmul.f32 %v1072, %v910
    %1076 = vrot.lane.b32.xlu0 %v1073, 64
    %v1077 = vpop.permute.xlu0 %1076
    %v1079 = vmul.f32 %v1072, %v1077
    %1081 = vrot.lane.b32.xlu0 %v1079, 32
    %v1082 = vpop.permute.xlu0 %1081
    %v1084 = vadd.f32 %v1074, %v1082
    %v1085 = vtanh.pop %v1084
    %1087 = vrot.lane.b32.xlu0 %v1085, 64
    %v1088 = vpop.permute.xlu0 %1087
    %v1090 = vmul.f32 %v1072, %v1088
    %1092 = vrot.lane.b32.xlu0 %v1090, 32
    %v1093 = vpop.permute.xlu0 %1092
    %v1094 = vsel %vm113, %v1093, 0
    %1096 = vmatprep.subr.mxu0 0.0
    %1097 = vmatpush1.msra.mxu0 %v105
    %1098 = vmatprep.subr.mxu0 0.0
    %1099 = vmatpush1.msra.mxu0 %v106
    %1100 = vmatprep.subr.mxu0 0.0
    %1101 = vmatpush1.msra.mxu0 %v107
    %1102 = vmatprep.subr.mxu0 0.0
    %1103 = vmatpush1.msra.mxu0 %v108
    %1104 = vmatprep.subr.mxu0 0.0
    %1105 = vmatpush1.msra.mxu0 0.0
    %1106 = vmatprep.subr.mxu0 0.0
    %1107 = vmatpush1.msra.mxu0 0.0
    %1108 = vmatprep.subr.mxu0 0.0
    %1109 = vmatpush1.msra.mxu0 0.0
    %1110 = vmatprep.subr.mxu0 0.0
    %1111 = vmatpush1.msra.mxu0 0.0
    %1112 = vmatprep.subr.mxu0 0.0
    %1113 = vmatpush1.msra.mxu0 0.0
    %1114 = vmatprep.subr.mxu0 0.0
    %1115 = vmatpush1.msra.mxu0 0.0
    %1116 = vmatprep.subr.mxu0 0.0
    %1117 = vmatpush1.msra.mxu0 0.0
    %1118 = vmatprep.subr.mxu0 0.0
    %1119 = vmatpush1.msra.mxu0 0.0
    %1120 = vmatprep.subr.mxu0 0.0
    %1121 = vmatpush1.msra.mxu0 0.0
    %1122 = vmatprep.subr.mxu0 0.0
    %1123 = vmatpush1.msra.mxu0 0.0
    %1124 = vmatprep.subr.mxu0 0.0
    %1125 = vmatpush1.msra.mxu0 0.0
    %1126 = vmatprep.subr.mxu0 0.0
    %1127 = vmatpush1.msra.mxu0 0.0
    %1128 = vmatprep.subr.mxu0 0.0
    %1129 = vmatpush1.msra.mxu0 0.0
    %1130 = vmatprep.subr.mxu0 0.0
    %1131 = vmatpush1.msra.mxu0 0.0
    %1132 = vmatprep.subr.mxu0 0.0
    %1133 = vmatpush1.msra.mxu0 0.0
    %1134 = vmatprep.subr.mxu0 0.0
    %1135 = vmatpush1.msra.mxu0 0.0
    %1136 = vmatprep.subr.mxu0 0.0
    %1137 = vmatpush1.msra.mxu0 0.0
    %1138 = vmatprep.subr.mxu0 0.0
    %1139 = vmatpush1.msra.mxu0 0.0
    %1140 = vmatprep.subr.mxu0 0.0
    %1141 = vmatpush1.msra.mxu0 0.0
    %1142 = vmatprep.subr.mxu0 0.0
    %1143 = vmatpush1.msra.mxu0 0.0
    %1144 = vmatprep.subr.mxu0 0.0
    %1145 = vmatpush1.msra.mxu0 0.0
    %1146 = vmatprep.subr.mxu0 0.0
    %1147 = vmatpush1.msra.mxu0 0.0
    %1148 = vmatprep.subr.mxu0 0.0
    %1149 = vmatpush1.msra.mxu0 0.0
    %1150 = vmatprep.subr.mxu0 0.0
    %1151 = vmatpush1.msra.mxu0 0.0
    %1152 = vmatprep.subr.mxu0 0.0
    %1153 = vmatpush1.msra.mxu0 0.0
    %1154 = vmatprep.subr.mxu0 0.0
    %1155 = vmatpush1.msra.mxu0 0.0
    %1156 = vmatprep.subr.mxu0 0.0
    %1157 = vmatpush1.msra.mxu0 0.0
    %1158 = vmatprep.subr.mxu0 0.0
    %1159 = vmatpush1.msra.mxu0 0.0
    %1160 = vmatprep.mubr.f32.mxu0 0.0
    %1161 = vmatmul.mubr.f32.gmra.mrb[0].mxu0 %v1094
    %v1162 = vpop.f32.mrb[0].mxu0
    %v1163 = vadd.f32 %v220, %v1162
    %v1164 = vpop.f32.mrb[0].mxu0
    %1165 = vdwg.mxu0
    %s1166 = scalar_lea.vmem [#allocation13], 40
    %1167 = vst [vmem:[%s1166] sm:$0xff] %v1163
    %s1168 = scalar_lea.vmem [#allocation4], 48
    %v1169 = vld [vmem:[%s1168] sm:$0xff]
    %1170 = vmatprep.subr.mxu0 0.0
    %1171 = vmatpush1.msra.mxu0 %v101
    %1172 = vmatprep.subr.mxu0 0.0
    %1173 = vmatpush1.msra.mxu0 %v102
    %1174 = vmatprep.subr.mxu0 0.0
    %1175 = vmatpush1.msra.mxu0 %v103
    %1176 = vmatprep.subr.mxu0 0.0
    %1177 = vmatpush1.msra.mxu0 %v104
    %1178 = vmatprep.subr.mxu0 0.0
    %1179 = vmatpush1.msra.mxu0 0.0
    %1180 = vmatprep.subr.mxu0 0.0
    %1181 = vmatpush1.msra.mxu0 0.0
    %1182 = vmatprep.subr.mxu0 0.0
    %1183 = vmatpush1.msra.mxu0 0.0
    %1184 = vmatprep.subr.mxu0 0.0
    %1185 = vmatpush1.msra.mxu0 0.0
    %1186 = vmatprep.subr.mxu0 0.0
    %1187 = vmatpush1.msra.mxu0 0.0
    %1188 = vmatprep.subr.mxu0 0.0
    %1189 = vmatpush1.msra.mxu0 0.0
    %1190 = vmatprep.subr.mxu0 0.0
    %1191 = vmatpush1.msra.mxu0 0.0
    %1192 = vmatprep.subr.mxu0 0.0
    %1193 = vmatpush1.msra.mxu0 0.0
    %1194 = vmatprep.subr.mxu0 0.0
    %1195 = vmatpush1.msra.mxu0 0.0
    %1196 = vmatprep.subr.mxu0 0.0
    %1197 = vmatpush1.msra.mxu0 0.0
    %1198 = vmatprep.subr.mxu0 0.0
    %1199 = vmatpush1.msra.mxu0 0.0
    %1200 = vmatprep.subr.mxu0 0.0
    %1201 = vmatpush1.msra.mxu0 0.0
    %1202 = vmatprep.subr.mxu0 0.0
    %1203 = vmatpush1.msra.mxu0 0.0
    %1204 = vmatprep.subr.mxu0 0.0
    %1205 = vmatpush1.msra.mxu0 0.0
    %1206 = vmatprep.subr.mxu0 0.0
    %1207 = vmatpush1.msra.mxu0 0.0
    %1208 = vmatprep.subr.mxu0 0.0
    %1209 = vmatpush1.msra.mxu0 0.0
    %1210 = vmatprep.subr.mxu0 0.0
    %1211 = vmatpush1.msra.mxu0 0.0
    %1212 = vmatprep.subr.mxu0 0.0
    %1213 = vmatpush1.msra.mxu0 0.0
    %1214 = vmatprep.subr.mxu0 0.0
    %1215 = vmatpush1.msra.mxu0 0.0
    %1216 = vmatprep.subr.mxu0 0.0
    %1217 = vmatpush1.msra.mxu0 0.0
    %1218 = vmatprep.subr.mxu0 0.0
    %1219 = vmatpush1.msra.mxu0 0.0
    %1220 = vmatprep.subr.mxu0 0.0
    %1221 = vmatpush1.msra.mxu0 0.0
    %1222 = vmatprep.subr.mxu0 0.0
    %1223 = vmatpush1.msra.mxu0 0.0
    %1224 = vmatprep.subr.mxu0 0.0
    %1225 = vmatpush1.msra.mxu0 0.0
    %1226 = vmatprep.subr.mxu0 0.0
    %1227 = vmatpush1.msra.mxu0 0.0
    %1228 = vmatprep.subr.mxu0 0.0
    %1229 = vmatpush1.msra.mxu0 0.0
    %1230 = vmatprep.subr.mxu0 0.0
    %1231 = vmatpush1.msra.mxu0 0.0
    %1232 = vmatprep.subr.mxu0 0.0
    %1233 = vmatpush1.msra.mxu0 0.0
    %1234 = vmatprep.mubr.f32.mxu0 0.0
    %1235 = vmatmul.mubr.f32.gmra.mrb[0].mxu0 %v1094
    %v1236 = vpop.f32.mrb[0].mxu0
    %v1237 = vadd.f32 0.0, %v1236
    %v1238 = vpop.f32.mrb[0].mxu0
    %1239 = vdwg.mxu0
    %v1240 = vadd.f32 %v1169, %v1237
    %v1241 = vxor.u32 %v1240, 2147483648
    %v1242 = vmul.f32 %v1241, 1.442695
    %v1243 = vpow.pop %v1242
    %v1244 = vadd.f32 %v1243, 1.0
    %v1245 = vrcp.pop %v1244
    %v1246 = vmul.f32 1.0, %v1245
    %v1247 = vtanh.pop %v1240
    %v1248 = vmul.f32 %v1246, %v1084
    %1250 = vrot.lane.b32.xlu0 %v1247, 64
    %v1251 = vpop.permute.xlu0 %1250
    %v1253 = vmul.f32 %v1246, %v1251
    %1255 = vrot.lane.b32.xlu0 %v1253, 32
    %v1256 = vpop.permute.xlu0 %1255
    %v1258 = vadd.f32 %v1248, %v1256
    %v1259 = vtanh.pop %v1258
    %1261 = vrot.lane.b32.xlu0 %v1259, 64
    %v1262 = vpop.permute.xlu0 %1261
    %v1264 = vmul.f32 %v1246, %v1262
    %1266 = vrot.lane.b32.xlu0 %v1264, 32
    %v1267 = vpop.permute.xlu0 %1266
    %v1268 = vsel %vm113, %v1267, 0
    %1270 = vmatprep.subr.mxu0 0.0
    %1271 = vmatpush1.msra.mxu0 %v105
    %1272 = vmatprep.subr.mxu0 0.0
    %1273 = vmatpush1.msra.mxu0 %v106
    %1274 = vmatprep.subr.mxu0 0.0
    %1275 = vmatpush1.msra.mxu0 %v107
    %1276 = vmatprep.subr.mxu0 0.0
    %1277 = vmatpush1.msra.mxu0 %v108
    %1278 = vmatprep.subr.mxu0 0.0
    %1279 = vmatpush1.msra.mxu0 0.0
    %1280 = vmatprep.subr.mxu0 0.0
    %1281 = vmatpush1.msra.mxu0 0.0
    %1282 = vmatprep.subr.mxu0 0.0
    %1283 = vmatpush1.msra.mxu0 0.0
    %1284 = vmatprep.subr.mxu0 0.0
    %1285 = vmatpush1.msra.mxu0 0.0
    %1286 = vmatprep.subr.mxu0 0.0
    %1287 = vmatpush1.msra.mxu0 0.0
    %1288 = vmatprep.subr.mxu0 0.0
    %1289 = vmatpush1.msra.mxu0 0.0
    %1290 = vmatprep.subr.mxu0 0.0
    %1291 = vmatpush1.msra.mxu0 0.0
    %1292 = vmatprep.subr.mxu0 0.0
    %1293 = vmatpush1.msra.mxu0 0.0
    %1294 = vmatprep.subr.mxu0 0.0
    %1295 = vmatpush1.msra.mxu0 0.0
    %1296 = vmatprep.subr.mxu0 0.0
    %1297 = vmatpush1.msra.mxu0 0.0
    %1298 = vmatprep.subr.mxu0 0.0
    %1299 = vmatpush1.msra.mxu0 0.0
    %1300 = vmatprep.subr.mxu0 0.0
    %1301 = vmatpush1.msra.mxu0 0.0
    %1302 = vmatprep.subr.mxu0 0.0
    %1303 = vmatpush1.msra.mxu0 0.0
    %1304 = vmatprep.subr.mxu0 0.0
    %1305 = vmatpush1.msra.mxu0 0.0
    %1306 = vmatprep.subr.mxu0 0.0
    %1307 = vmatpush1.msra.mxu0 0.0
    %1308 = vmatprep.subr.mxu0 0.0
    %1309 = vmatpush1.msra.mxu0 0.0
    %1310 = vmatprep.subr.mxu0 0.0
    %1311 = vmatpush1.msra.mxu0 0.0
    %1312 = vmatprep.subr.mxu0 0.0
    %1313 = vmatpush1.msra.mxu0 0.0
    %1314 = vmatprep.subr.mxu0 0.0
    %1315 = vmatpush1.msra.mxu0 0.0
    %1316 = vmatprep.subr.mxu0 0.0
    %1317 = vmatpush1.msra.mxu0 0.0
    %1318 = vmatprep.subr.mxu0 0.0
    %1319 = vmatpush1.msra.mxu0 0.0
    %1320 = vmatprep.subr.mxu0 0.0
    %1321 = vmatpush1.msra.mxu0 0.0
    %1322 = vmatprep.subr.mxu0 0.0
    %1323 = vmatpush1.msra.mxu0 0.0
    %1324 = vmatprep.subr.mxu0 0.0
    %1325 = vmatpush1.msra.mxu0 0.0
    %1326 = vmatprep.subr.mxu0 0.0
    %1327 = vmatpush1.msra.mxu0 0.0
    %1328 = vmatprep.subr.mxu0 0.0
    %1329 = vmatpush1.msra.mxu0 0.0
    %1330 = vmatprep.subr.mxu0 0.0
    %1331 = vmatpush1.msra.mxu0 0.0
    %1332 = vmatprep.subr.mxu0 0.0
    %1333 = vmatpush1.msra.mxu0 0.0
    %1334 = vmatprep.mubr.f32.mxu0 0.0
    %1335 = vmatmul.mubr.f32.gmra.mrb[0].mxu0 %v1268
    %v1336 = vpop.f32.mrb[0].mxu0
    %v1337 = vadd.f32 %v220, %v1336
    %v1338 = vpop.f32.mrb[0].mxu0
    %1339 = vdwg.mxu0
    %s1340 = scalar_lea.vmem [#allocation13], 48
    %1341 = vst [vmem:[%s1340] sm:$0xff] %v1337
    %s1342 = scalar_lea.vmem [#allocation4], 56
    %v1343 = vld [vmem:[%s1342] sm:$0xff]
    %1344 = vmatprep.subr.mxu0 0.0
    %1345 = vmatpush1.msra.mxu0 %v101
    %1346 = vmatprep.subr.mxu0 0.0
    %1347 = vmatpush1.msra.mxu0 %v102
    %1348 = vmatprep.subr.mxu0 0.0
    %1349 = vmatpush1.msra.mxu0 %v103
    %1350 = vmatprep.subr.mxu0 0.0
    %1351 = vmatpush1.msra.mxu0 %v104
    %1352 = vmatprep.subr.mxu0 0.0
    %1353 = vmatpush1.msra.mxu0 0.0
    %1354 = vmatprep.subr.mxu0 0.0
    %1355 = vmatpush1.msra.mxu0 0.0
    %1356 = vmatprep.subr.mxu0 0.0
    %1357 = vmatpush1.msra.mxu0 0.0
    %1358 = vmatprep.subr.mxu0 0.0
    %1359 = vmatpush1.msra.mxu0 0.0
    %1360 = vmatprep.subr.mxu0 0.0
    %1361 = vmatpush1.msra.mxu0 0.0
    %1362 = vmatprep.subr.mxu0 0.0
    %1363 = vmatpush1.msra.mxu0 0.0
    %1364 = vmatprep.subr.mxu0 0.0
    %1365 = vmatpush1.msra.mxu0 0.0
    %1366 = vmatprep.subr.mxu0 0.0
    %1367 = vmatpush1.msra.mxu0 0.0
    %1368 = vmatprep.subr.mxu0 0.0
    %1369 = vmatpush1.msra.mxu0 0.0
    %1370 = vmatprep.subr.mxu0 0.0
    %1371 = vmatpush1.msra.mxu0 0.0
    %1372 = vmatprep.subr.mxu0 0.0
    %1373 = vmatpush1.msra.mxu0 0.0
    %1374 = vmatprep.subr.mxu0 0.0
    %1375 = vmatpush1.msra.mxu0 0.0
    %1376 = vmatprep.subr.mxu0 0.0
    %1377 = vmatpush1.msra.mxu0 0.0
    %1378 = vmatprep.subr.mxu0 0.0
    %1379 = vmatpush1.msra.mxu0 0.0
    %1380 = vmatprep.subr.mxu0 0.0
    %1381 = vmatpush1.msra.mxu0 0.0
    %1382 = vmatprep.subr.mxu0 0.0
    %1383 = vmatpush1.msra.mxu0 0.0
    %1384 = vmatprep.subr.mxu0 0.0
    %1385 = vmatpush1.msra.mxu0 0.0
    %1386 = vmatprep.subr.mxu0 0.0
    %1387 = vmatpush1.msra.mxu0 0.0
    %1388 = vmatprep.subr.mxu0 0.0
    %1389 = vmatpush1.msra.mxu0 0.0
    %1390 = vmatprep.subr.mxu0 0.0
    %1391 = vmatpush1.msra.mxu0 0.0
    %1392 = vmatprep.subr.mxu0 0.0
    %1393 = vmatpush1.msra.mxu0 0.0
    %1394 = vmatprep.subr.mxu0 0.0
    %1395 = vmatpush1.msra.mxu0 0.0
    %1396 = vmatprep.subr.mxu0 0.0
    %1397 = vmatpush1.msra.mxu0 0.0
    %1398 = vmatprep.subr.mxu0 0.0
    %1399 = vmatpush1.msra.mxu0 0.0
    %1400 = vmatprep.subr.mxu0 0.0
    %1401 = vmatpush1.msra.mxu0 0.0
    %1402 = vmatprep.subr.mxu0 0.0
    %1403 = vmatpush1.msra.mxu0 0.0
    %1404 = vmatprep.subr.mxu0 0.0
    %1405 = vmatpush1.msra.mxu0 0.0
    %1406 = vmatprep.subr.mxu0 0.0
    %1407 = vmatpush1.msra.mxu0 0.0
    %1408 = vmatprep.mubr.f32.mxu0 0.0
    %1409 = vmatmul.mubr.f32.gmra.mrb[0].mxu0 %v1268
    %v1410 = vpop.f32.mrb[0].mxu0
    %v1411 = vadd.f32 0.0, %v1410
    %v1412 = vpop.f32.mrb[0].mxu0
    %1413 = vdwg.mxu0
    %v1414 = vadd.f32 %v1343, %v1411
    %v1415 = vxor.u32 %v1414, 2147483648
    %v1416 = vmul.f32 %v1415, 1.442695
    %v1417 = vpow.pop %v1416
    %v1418 = vadd.f32 %v1417, 1.0
    %v1419 = vrcp.pop %v1418
    %v1420 = vmul.f32 1.0, %v1419
    %v1421 = vtanh.pop %v1414
    %v1422 = vmul.f32 %v1420, %v1258
    %1424 = vrot.lane.b32.xlu0 %v1421, 64
    %v1425 = vpop.permute.xlu0 %1424
    %v1427 = vmul.f32 %v1420, %v1425
    %1429 = vrot.lane.b32.xlu0 %v1427, 32
    %v1430 = vpop.permute.xlu0 %1429
    %v1432 = vadd.f32 %v1422, %v1430
    %v1433 = vtanh.pop %v1432
    %1435 = vrot.lane.b32.xlu0 %v1433, 64
    %v1436 = vpop.permute.xlu0 %1435
    %v1438 = vmul.f32 %v1420, %v1436
    %1440 = vrot.lane.b32.xlu0 %v1438, 32
    %v1441 = vpop.permute.xlu0 %1440
    %v1442 = vsel %vm113, %v1441, 0
    %1444 = vmatprep.subr.mxu0 0.0
    %1445 = vmatpush1.msra.mxu0 %v105
    %1446 = vmatprep.subr.mxu0 0.0
    %1447 = vmatpush1.msra.mxu0 %v106
    %1448 = vmatprep.subr.mxu0 0.0
    %1449 = vmatpush1.msra.mxu0 %v107
    %1450 = vmatprep.subr.mxu0 0.0
    %1451 = vmatpush1.msra.mxu0 %v108
    %1452 = vmatprep.subr.mxu0 0.0
    %1453 = vmatpush1.msra.mxu0 0.0
    %1454 = vmatprep.subr.mxu0 0.0
    %1455 = vmatpush1.msra.mxu0 0.0
    %1456 = vmatprep.subr.mxu0 0.0
    %1457 = vmatpush1.msra.mxu0 0.0
    %1458 = vmatprep.subr.mxu0 0.0
    %1459 = vmatpush1.msra.mxu0 0.0
    %1460 = vmatprep.subr.mxu0 0.0
    %1461 = vmatpush1.msra.mxu0 0.0
    %1462 = vmatprep.subr.mxu0 0.0
    %1463 = vmatpush1.msra.mxu0 0.0
    %1464 = vmatprep.subr.mxu0 0.0
    %1465 = vmatpush1.msra.mxu0 0.0
    %1466 = vmatprep.subr.mxu0 0.0
    %1467 = vmatpush1.msra.mxu0 0.0
    %1468 = vmatprep.subr.mxu0 0.0
    %1469 = vmatpush1.msra.mxu0 0.0
    %1470 = vmatprep.subr.mxu0 0.0
    %1471 = vmatpush1.msra.mxu0 0.0
    %1472 = vmatprep.subr.mxu0 0.0
    %1473 = vmatpush1.msra.mxu0 0.0
    %1474 = vmatprep.subr.mxu0 0.0
    %1475 = vmatpush1.msra.mxu0 0.0
    %1476 = vmatprep.subr.mxu0 0.0
    %1477 = vmatpush1.msra.mxu0 0.0
    %1478 = vmatprep.subr.mxu0 0.0
    %1479 = vmatpush1.msra.mxu0 0.0
    %1480 = vmatprep.subr.mxu0 0.0
    %1481 = vmatpush1.msra.mxu0 0.0
    %1482 = vmatprep.subr.mxu0 0.0
    %1483 = vmatpush1.msra.mxu0 0.0
    %1484 = vmatprep.subr.mxu0 0.0
    %1485 = vmatpush1.msra.mxu0 0.0
    %1486 = vmatprep.subr.mxu0 0.0
    %1487 = vmatpush1.msra.mxu0 0.0
    %1488 = vmatprep.subr.mxu0 0.0
    %1489 = vmatpush1.msra.mxu0 0.0
    %1490 = vmatprep.subr.mxu0 0.0
    %1491 = vmatpush1.msra.mxu0 0.0
    %1492 = vmatprep.subr.mxu0 0.0
    %1493 = vmatpush1.msra.mxu0 0.0
    %1494 = vmatprep.subr.mxu0 0.0
    %1495 = vmatpush1.msra.mxu0 0.0
    %1496 = vmatprep.subr.mxu0 0.0
    %1497 = vmatpush1.msra.mxu0 0.0
    %1498 = vmatprep.subr.mxu0 0.0
    %1499 = vmatpush1.msra.mxu0 0.0
    %1500 = vmatprep.subr.mxu0 0.0
    %1501 = vmatpush1.msra.mxu0 0.0
    %1502 = vmatprep.subr.mxu0 0.0
    %1503 = vmatpush1.msra.mxu0 0.0
    %1504 = vmatprep.subr.mxu0 0.0
    %1505 = vmatpush1.msra.mxu0 0.0
    %1506 = vmatprep.subr.mxu0 0.0
    %1507 = vmatpush1.msra.mxu0 0.0
    %1508 = vmatprep.mubr.f32.mxu0 0.0
    %1509 = vmatmul.mubr.f32.gmra.mrb[0].mxu0 %v1442
    %v1510 = vpop.f32.mrb[0].mxu0
    %v1511 = vadd.f32 %v220, %v1510
    %v1512 = vpop.f32.mrb[0].mxu0
    %1513 = vdwg.mxu0
    %s1514 = scalar_lea.vmem [#allocation13], 56
    %1515 = vst [vmem:[%s1514] sm:$0xff] %v1511
    %1517 = vst.msk [vmem:[#allocation2] sm:$0xff] %vm113, %v1441
    %1519 = vrot.lane.b32.xlu0 %v1432, 96
    %v1520 = vpop.permute.xlu0 %1519
    %1522 = vst.msk [vmem:[#allocation3] sm:$0xff] %vm113, %v1520
    // Predicated region
    $region50: #{tpu_custom_call.1} parent=1 // pred_check
      %p1523 = pneg %p92
    $region51: #{tpu_custom_call.1} parent=1 // pred_check_branch
      %1525 = sbr.rel (%p1523) target = $region53
    $region52: #{tpu_custom_call.1} parent=1 // pred_region
      %1526 = vst.msk [vmem:[#allocation14] sm:$0xff] %vm113, %v1441
      %1527 = vst.msk [vmem:[#allocation16] sm:$0xff] %vm113, %v1520
    $region53: #{tpu_custom_call.1} parent=1 // pred_fallthru
      _
    // Predicated region
    $region54: #{tpu_custom_call.1} parent=1 // pred_check
      _
    $region55: #{tpu_custom_call.1} parent=1 // pred_check_branch
      %1529 = sbr.rel (0) target = $region57
    $region56: #{tpu_custom_call.1} parent=1 // pred_region
      %s1531 = ssub.s32 1024, 1024
      %1532 = vsyncadd [#allocation6], %s1531
      %s1533 = sshll.u32 [#allocation13], 4
      %s1534 = int_to_ptr.vmem [resolvable:$true] %s1533
      %1539 = dma.vmem_to_hbm [thread:$0]  %s1534, 1024, %s6, [#allocation6], 128, 128, 8
    $region57: #{tpu_custom_call.1} parent=1 // pred_fallthru
      _
    // Predicated region
    $region58: #{tpu_custom_call.1} parent=1 // pred_check
      _
    $region59: #{tpu_custom_call.1} parent=1 // pred_check_branch
      %1541 = sbr.rel (0) target = $region61
    $region60: #{tpu_custom_call.1} parent=1 // pred_region
      %s1543 = ssub.s32 128, 128
      %1544 = vsyncadd [#allocation15], %s1543
      %s1546 = sshll.u32 [#allocation14], 4
      %s1547 = int_to_ptr.vmem [resolvable:$true] %s1546
      %1549 = dma.vmem_to_hbm [thread:$0]  %s1547, 128, %s7, [#allocation15]
    $region61: #{tpu_custom_call.1} parent=1 // pred_fallthru
      _
    // Predicated region
    $region62: #{tpu_custom_call.1} parent=1 // pred_check
      _
    $region63: #{tpu_custom_call.1} parent=1 // pred_check_branch
      %1551 = sbr.rel (0) target = $region65
    $region64: #{tpu_custom_call.1} parent=1 // pred_region
      %s1553 = ssub.s32 128, 128
      %1554 = vsyncadd [#allocation15], %s1553
      %s1556 = sshll.u32 [#allocation16], 4
      %s1557 = int_to_ptr.vmem [resolvable:$true] %s1556
      %1559 = dma.vmem_to_hbm [thread:$0]  %s1557, 128, %s8, [#allocation15]
    $region65: #{tpu_custom_call.1} parent=1 // pred_fallthru
      _
    // Predicated region
    $region66: #{tpu_custom_call.1} parent=1 // pred_check
      _
    $region67: #{tpu_custom_call.1} parent=1 // pred_check_branch
      %1561 = sbr.rel (0) target = $region69
    $region68: #{tpu_custom_call.1} parent=1 // pred_region
      %1562 = dma.done [#allocation6], 1024
    $region69: #{tpu_custom_call.1} parent=1 // pred_fallthru
      _
    // Predicated region
    $region70: #{tpu_custom_call.1} parent=1 // pred_check
      _
    $region71: #{tpu_custom_call.1} parent=1 // pred_check_branch
      %1564 = sbr.rel (0) target = $region73
    $region72: #{tpu_custom_call.1} parent=1 // pred_region
      %1565 = dma.done [#allocation15], 128
    $region73: #{tpu_custom_call.1} parent=1 // pred_fallthru
      _
    // Predicated region
    $region74: #{tpu_custom_call.1} parent=1 // pred_check
      _
    $region75: #{tpu_custom_call.1} parent=1 // pred_check_branch
      %1567 = sbr.rel (0) target = $region77
    $region76: #{tpu_custom_call.1} parent=1 // pred_region
      %1568 = dma.done [#allocation15], 128
    $region77: #{tpu_custom_call.1} parent=1 // pred_fallthru
      _
    %1569 = vsyncpa [#allocation5], 1
    %1570 = vsyncpa [#allocation8], 1
    %1571 = vsyncpa [#allocation11], 1
    %1572 = vsyncpa [#allocation6], 1
    %1573 = vsyncpa [#allocation15], 1

</llo_original>
